<compile_context>
chip_gen: v6e
topology: v6e:2x2x1
jax: 0.10.0
libtpu: 0.0.40
codegen_flags: <defaults>
</compile_context>

<pallas_src>
import functools
import math

import jax
import jax.numpy as jnp
from jax import lax
from jax.experimental import pallas as pl
from jax.experimental.pallas import tpu as pltpu

COMPUTE_DTYPE = jnp.bfloat16  # MXU operand dtype (f32 accumulation everywhere)


# ----------------------------- tile selection ------------------------------

def _pick_row_tile(m, target=256):
    """Largest power-of-two (>=8) tile that divides m, else the full dim."""
    t = target
    while t >= 8:
        if m % t == 0:
            return t
        t //= 2
    return m


def _pick_col_tile(n, target=512):
    """Largest multiple-of-128 power-of-two tile that divides n, else full dim."""
    t = target
    while t >= 128:
        if n % t == 0:
            return t
        t //= 2
    return n


# --------------------------- fused linear kernel ---------------------------

def _linear_kernel(*refs, has_ln, has_bias, has_res, activation):
    it = iter(refs)
    x_ref = next(it)
    if has_ln:
        g_ref = next(it)
        beta_ref = next(it)
    w_ref = next(it)
    if has_bias:
        b_ref = next(it)
    if has_res:
        r_ref = next(it)
    o_ref = next(it)

    x = x_ref[...].astype(jnp.float32)
    if has_ln:
        mean = jnp.mean(x, axis=-1, keepdims=True)
        var = jnp.mean(jnp.square(x - mean), axis=-1, keepdims=True)
        x = (x - mean) * lax.rsqrt(var + 1e-5)
        x = x * g_ref[...].astype(jnp.float32) + beta_ref[...].astype(jnp.float32)

    acc = jnp.dot(x.astype(COMPUTE_DTYPE), w_ref[...].astype(COMPUTE_DTYPE),
                  preferred_element_type=jnp.float32)
    if has_bias:
        acc = acc + b_ref[...].astype(jnp.float32)
    if activation == "quick_gelu":
        acc = acc * jax.nn.sigmoid(1.702 * acc)   # CLIP QuickGELU
    if has_res:
        acc = acc + r_ref[...].astype(jnp.float32)
    o_ref[...] = acc.astype(o_ref.dtype)


def pallas_linear(x, w, b=None, *, ln_g=None, ln_b=None, residual=None,
                  activation=None):
    """x: [M, K] (f32), w: [K, N] (pre-transposed, bf16). Optional fused
    LayerNorm prologue, bias, QuickGELU and residual-add epilogues."""
    M, K = x.shape
    K2, N = w.shape
    assert K == K2
    tm = _pick_row_tile(M)
    tn = _pick_col_tile(N)

    has_ln = ln_g is not None
    has_bias = b is not None
    has_res = residual is not None

    inputs = [x]
    in_specs = [pl.BlockSpec((tm, K), lambda i, j: (i, 0))]
    if has_ln:
        inputs += [ln_g.reshape(1, K), ln_b.reshape(1, K)]
        in_specs += [pl.BlockSpec((1, K), lambda i, j: (0, 0)),
                     pl.BlockSpec((1, K), lambda i, j: (0, 0))]
    inputs.append(w)
    in_specs.append(pl.BlockSpec((K, tn), lambda i, j: (0, j)))
    if has_bias:
        inputs.append(b.reshape(1, N))
        in_specs.append(pl.BlockSpec((1, tn), lambda i, j: (0, j)))
    if has_res:
        inputs.append(residual)
        in_specs.append(pl.BlockSpec((tm, tn), lambda i, j: (i, j)))

    kernel = functools.partial(_linear_kernel, has_ln=has_ln, has_bias=has_bias,
                               has_res=has_res, activation=activation)
    return pl.pallas_call(
        kernel,
        out_shape=jax.ShapeDtypeStruct((M, N), x.dtype),
        grid=(M // tm, N // tn),
        in_specs=in_specs,
        out_specs=pl.BlockSpec((tm, tn), lambda i, j: (i, j)),
        compiler_params=pltpu.CompilerParams(
            dimension_semantics=("parallel", "parallel")),
    )(*inputs)


# ---------------------- fused attention block kernel -----------------------

def _attn_block_kernel(qkv_ref, x_ref, wout_ref, bout_ref, o_ref, *, heads, scale):
    W = x_ref.shape[-1]
    dh = W // heads
    qkv = qkv_ref[0].astype(jnp.float32)       # (L, 3W)

    outs = []
    for h in range(heads):
        q = qkv[:, h * dh:(h + 1) * dh].astype(COMPUTE_DTYPE)
        k = qkv[:, W + h * dh:W + (h + 1) * dh].astype(COMPUTE_DTYPE)
        v = qkv[:, 2 * W + h * dh:2 * W + (h + 1) * dh].astype(COMPUTE_DTYPE)
        s = lax.dot_general(q, k, (((1,), (1,)), ((), ())),
                            preferred_element_type=jnp.float32) * scale
        s = s - jnp.max(s, axis=-1, keepdims=True)
        p = jnp.exp(s)
        p = p / jnp.sum(p, axis=-1, keepdims=True)
        o_h = jnp.dot(p.astype(COMPUTE_DTYPE), v,
                      preferred_element_type=jnp.float32)
        outs.append(o_h)
    o_cat = outs[0] if heads == 1 else jnp.concatenate(outs, axis=-1)   # (L, W)

    proj = jnp.dot(o_cat.astype(COMPUTE_DTYPE), wout_ref[...].astype(COMPUTE_DTYPE),
                   preferred_element_type=jnp.float32)
    proj = proj + bout_ref[...].astype(jnp.float32)
    o_ref[0] = (x_ref[0].astype(jnp.float32) + proj).astype(o_ref.dtype)


def pallas_attention_block(qkv, x, w_out, b_out, heads, scale):
    """qkv: [B, L, 3W], x (residual stream): [B, L, W], w_out: [W, W] (bf16).
    Returns x + MultiHeadAttention(qkv) @ w_out + b_out, all fused per batch."""
    B, L, W3 = qkv.shape
    W = x.shape[-1]
    return pl.pallas_call(
        functools.partial(_attn_block_kernel, heads=heads, scale=scale),
        out_shape=jax.ShapeDtypeStruct((B, L, W), x.dtype),
        grid=(B,),
        in_specs=[
            pl.BlockSpec((1, L, W3), lambda b: (b, 0, 0)),
            pl.BlockSpec((1, L, W), lambda b: (b, 0, 0)),
            pl.BlockSpec((W, W), lambda b: (0, 0)),
            pl.BlockSpec((1, W), lambda b: (0, 0)),
        ],
        out_specs=pl.BlockSpec((1, L, W), lambda b: (b, 0, 0)),
        compiler_params=pltpu.CompilerParams(dimension_semantics=("parallel",)),
    )(qkv, x, w_out, b_out.reshape(1, W))


# ------------------------------ layernorm (ln_pre) --------------------------

def _layernorm_kernel(x_ref, g_ref, b_ref, o_ref):
    x = x_ref[...].astype(jnp.float32)
    mean = jnp.mean(x, axis=-1, keepdims=True)
    var = jnp.mean(jnp.square(x - mean), axis=-1, keepdims=True)
    y = (x - mean) * lax.rsqrt(var + 1e-5)
    o_ref[...] = (y * g_ref[...].astype(jnp.float32)
                  + b_ref[...].astype(jnp.float32)).astype(o_ref.dtype)


def pallas_layernorm(x, g, b):
    M, D = x.shape
    tm = _pick_row_tile(M)
    return pl.pallas_call(
        _layernorm_kernel,
        out_shape=jax.ShapeDtypeStruct((M, D), x.dtype),
        grid=(M // tm,),
        in_specs=[
            pl.BlockSpec((tm, D), lambda i: (i, 0)),
            pl.BlockSpec((1, D), lambda i: (0, 0)),
            pl.BlockSpec((1, D), lambda i: (0, 0)),
        ],
        out_specs=pl.BlockSpec((tm, D), lambda i: (i, 0)),
        compiler_params=pltpu.CompilerParams(dimension_semantics=("parallel",)),
    )(x, g.reshape(1, D), b.reshape(1, D))


# ------------------ l2-normalize (+ token weight) fused ---------------------

def _l2norm_weight_kernel(x_ref, w_ref, o_ref):
    x = x_ref[...].astype(jnp.float32)
    n = jnp.sqrt(jnp.sum(x * x, axis=-1, keepdims=True))
    y = x / (n + 1e-32)                                   # matches torch spec exactly
    o_ref[...] = (y * w_ref[...].astype(jnp.float32)).astype(o_ref.dtype)


def pallas_l2norm_weight(x, w=None):
    M, D = x.shape
    if w is None:
        w = jnp.ones((M, 1), dtype=x.dtype)
    tm = _pick_row_tile(M)
    return pl.pallas_call(
        _l2norm_weight_kernel,
        out_shape=jax.ShapeDtypeStruct((M, D), x.dtype),
        grid=(M // tm,),
        in_specs=[
            pl.BlockSpec((tm, D), lambda i: (i, 0)),
            pl.BlockSpec((tm, 1), lambda i: (i, 0)),
        ],
        out_specs=pl.BlockSpec((tm, D), lambda i: (i, 0)),
        compiler_params=pltpu.CompilerParams(dimension_semantics=("parallel",)),
    )(x, w)


# ------------------ correlation kernels (scale fused in) --------------------

def _bmm_nt_scale_kernel(a_ref, b_ref, s_ref, o_ref):
    a = a_ref[0].astype(jnp.float32)
    b = b_ref[0].astype(jnp.float32)
    acc = lax.dot_general(a, b, (((1,), (1,)), ((), ())),
                          preferred_element_type=jnp.float32)
    o_ref[0] = (acc * s_ref[0, 0].astype(jnp.float32)).astype(o_ref.dtype)


def pallas_bmm_nt_scale(a, b, scale):
    """scale * einsum('BLD,BlD->BLl') with the transpose done on VMEM values."""
    B, L, D = a.shape
    return pl.pallas_call(
        _bmm_nt_scale_kernel,
        out_shape=jax.ShapeDtypeStruct((B, L, L), jnp.float32),
        grid=(B,),
        in_specs=[
            pl.BlockSpec((1, L, D), lambda i: (i, 0, 0)),
            pl.BlockSpec((1, L, D), lambda i: (i, 0, 0)),
            pl.BlockSpec((1, 1), lambda i: (0, 0)),
        ],
        out_specs=pl.BlockSpec((1, L, L), lambda i: (i, 0, 0)),
        compiler_params=pltpu.CompilerParams(dimension_semantics=("parallel",)),
    )(a, b, scale)


def _pair_logits_kernel(a_ref, b_ref, s_ref, o_ref, *, inv_l):
    a = a_ref[...].astype(jnp.float32)
    b = b_ref[...].astype(jnp.float32)
    acc = lax.dot_general(a, b, (((1,), (1,)), ((), ())),
                          preferred_element_type=jnp.float32)
    o_ref[...] = (acc * (s_ref[0, 0].astype(jnp.float32) * inv_l)).astype(o_ref.dtype)


def pallas_pair_logits(a, b, scale, inv_l):
    """(scale*inv_l) * a @ b^T without any HBM transpose of b."""
    M, K = a.shape
    N = b.shape[0]
    return pl.pallas_call(
        functools.partial(_pair_logits_kernel, inv_l=float(inv_l)),
        out_shape=jax.ShapeDtypeStruct((M, N), jnp.float32),
        grid=(1,),
        in_specs=[
            pl.BlockSpec((M, K), lambda i: (0, 0)),
            pl.BlockSpec((N, K), lambda i: (0, 0)),
            pl.BlockSpec((1, 1), lambda i: (0, 0)),
        ],
        out_specs=pl.BlockSpec((M, N), lambda i: (0, 0)),
        compiler_params=pltpu.CompilerParams(dimension_semantics=("arbitrary",)),
    )(a, b, scale)


# ----------------------------- Parameter init -------------------------------
# Matmul weights are stored pre-transposed ([K, N]) and cast to bf16 once here,
# so no per-forward .T / dtype conversion passes over HBM are needed.

def init_vit_params(key, in_channels, input_resolution, patch_size, width,
                    layers, output_dim):
    grid = input_resolution // patch_size
    n_tok = grid * grid + 1
    scale = width ** -0.5
    keys = jax.random.split(key, 4 + layers)
    f32 = jnp.float32
    wdt = COMPUTE_DTYPE
    params = {
        # conv1 flattened+transposed: [C*p*p, width]
        "conv1_w": (jax.random.normal(
            keys[0], (in_channels * patch_size * patch_size, width), f32) * scale).astype(wdt),
        "class_embedding": jax.random.normal(keys[1], (width,), f32) * scale,
        "positional_embedding": jax.random.normal(keys[2], (n_tok, width), f32) * scale,
        "ln_pre_g": jnp.ones((width,), f32), "ln_pre_b": jnp.zeros((width,), f32),
        "ln_post_g": jnp.ones((width,), f32), "ln_post_b": jnp.zeros((width,), f32),
        "proj": (jax.random.normal(keys[3], (width, output_dim), f32) * scale).astype(wdt),
        "blocks": [],
    }
    for l in range(layers):
        bk = jax.random.split(keys[4 + l], 4)
        params["blocks"].append({
            "ln1_g": jnp.ones((width,), f32), "ln1_b": jnp.zeros((width,), f32),
            "ln2_g": jnp.ones((width,), f32), "ln2_b": jnp.zeros((width,), f32),
            "in_proj_w": (jax.random.normal(bk[0], (width, 3 * width), f32) * 0.02).astype(wdt),
            "in_proj_b": jnp.zeros((3 * width,), f32),
            "out_proj_w": (jax.random.normal(bk[1], (width, width), f32) * 0.02).astype(wdt),
            "out_proj_b": jnp.zeros((width,), f32),
            "c_fc_w": (jax.random.normal(bk[2], (width, 4 * width), f32) * 0.02).astype(wdt),
            "c_fc_b": jnp.zeros((4 * width,), f32),
            "c_proj_w": (jax.random.normal(bk[3], (4 * width, width), f32) * 0.02).astype(wdt),
            "c_proj_b": jnp.zeros((width,), f32),
        })
    return params


# ----------------------------- Model forward --------------------------------

def residual_attention_block(x, p, heads):
    """x: [B, L, W] (f32 residual stream)."""
    B, L, W = x.shape
    dh = W // heads
    x2d = x.reshape(B * L, W)

    # ln_1 fused into the qkv projection
    qkv = pallas_linear(x2d, p["in_proj_w"], p["in_proj_b"],
                        ln_g=p["ln1_g"], ln_b=p["ln1_b"])            # [B*L, 3W]
    # fused multi-head attention + out_proj + residual (head-major, no transposes)
    x = pallas_attention_block(qkv.reshape(B, L, 3 * W), x,
                               p["out_proj_w"], p["out_proj_b"],
                               heads, 1.0 / math.sqrt(dh))            # [B, L, W]

    # ln_2 fused into c_fc (+ QuickGELU); residual add fused into c_proj
    x2d = x.reshape(B * L, W)
    h = pallas_linear(x2d, p["c_fc_w"], p["c_fc_b"],
                      ln_g=p["ln2_g"], ln_b=p["ln2_b"], activation="quick_gelu")
    x2d = pallas_linear(h, p["c_proj_w"], p["c_proj_b"], residual=x2d)
    return x2d.reshape(B, L, W)


def vision_transformer_forward(params, image, patch_size, width, heads, token_type):
    """image: NCHW [B, C, H, W]"""
    B, C, H, Wd = image.shape
    p = patch_size
    g = H // p

    # Patch embed: conv(stride=patch, kernel=patch, no bias) == patch-flatten matmul.
    x = image.reshape(B, C, g, p, g, p).transpose(0, 2, 4, 1, 3, 5)   # [B, g, g, C, p, p]
    x = x.reshape(B * g * g, C * p * p)
    tok = pallas_linear(x, params["conv1_w"])                          # [B*g*g, width]
    tok = tok.reshape(B, g * g, width)

    cls = jnp.broadcast_to(params["class_embedding"].reshape(1, 1, width), (B, 1, width))
    x = jnp.concatenate([cls, tok], axis=1) + params["positional_embedding"][None]
    L1 = x.shape[1]

    x = pallas_layernorm(x.reshape(B * L1, width),
                         params["ln_pre_g"], params["ln_pre_b"]).reshape(B, L1, width)

    for blk in params["blocks"]:
        x = residual_attention_block(x, blk, heads)

    if token_type == "class embedding":
        xc = x[:, 0, :]                                                # [B, width]
        return pallas_linear(xc, params["proj"],
                             ln_g=params["ln_post_g"], ln_b=params["ln_post_b"])
    elif token_type == "all embedding":
        xt = x[:, 1:, :]                                               # drop class token
        Bn, Ln, _ = xt.shape
        h = pallas_linear(xt.reshape(Bn * Ln, width), params["proj"],
                          ln_g=params["ln_post_g"], ln_b=params["ln_post_b"])
        return h.reshape(Bn, Ln, -1)                                   # [B, L, embed_dim]
    else:
        raise ValueError(token_type)


def solarclip_forward(params, image_mag, image_H,
                      token_weight_1=None, token_weight_2=None, *, config):
    token_type = config["token_type"]

    mag = vision_transformer_forward(params["visual_mag"], image_mag,
                                     config["patch_mag"], config["width"],
                                     config["heads"], token_type)
    Hf = vision_transformer_forward(params["visual_H"], image_H,
                                    config["patch_H"], config["width"],
                                    config["heads"], token_type)

    logit_scale = jnp.exp(params["logit_scale"]).reshape(1, 1).astype(jnp.float32)

    if token_type == "class embedding":
        mag = pallas_l2norm_weight(mag)
        Hf = pallas_l2norm_weight(Hf)
        logits_per_mag = pallas_pair_logits(mag, Hf, logit_scale, 1.0)
        return logits_per_mag, logits_per_mag.T, None

    # --- 'all embedding' branch ---
    B, L, D = mag.shape
    if token_weight_1 is None:
        token_weight_1 = jnp.ones((B, L), dtype=mag.dtype)
    if token_weight_2 is None:
        token_weight_2 = jnp.ones((B, L), dtype=Hf.dtype)

    # fused l2-normalize + token-weight multiply
    mag = pallas_l2norm_weight(mag.reshape(B * L, D),
                               token_weight_1.reshape(B * L, 1)).reshape(B, L, D)
    Hf = pallas_l2norm_weight(Hf.reshape(B * L, D),
                              token_weight_2.reshape(B * L, 1)).reshape(B, L, D)

    # logit_scale fused into both correlation kernels; mean(/L) fused into pair logits.
    inner_cor = pallas_bmm_nt_scale(mag, Hf, logit_scale)              # [B, L, L]
    logits_per_mag = pallas_pair_logits(mag.reshape(B, L * D), Hf.reshape(B, L * D),
                                        logit_scale, 1.0 / L)          # [B, B]
    return logits_per_mag, logits_per_mag.T, inner_cor


# ----------------------------------- Main ------------------------------------

if __name__ == "__main__":
    # Small-but-consistent config (vision_heads = width // 64 => width >= 64).
    embed_dim = 32
    image_resolution_mag = 16
    image_resolution_H = 16
    vision_width = 64
    vision_layers_mag = 2
    vision_layers_H = 2
    vision_patch_size_mag = 8
    vision_patch_size_H = 8
    transformer_token_type = "all embedding"
    vision_heads = vision_width // 64

    root = jax.random.PRNGKey(0)
    k_mag, k_H, k_img1, k_img2 = jax.random.split(root, 4)

    params = {
        "visual_mag": init_vit_params(k_mag, 1, image_resolution_mag,
                                      vision_patch_size_mag, vision_width,
                                      vision_layers_mag, embed_dim),
        "visual_H": init_vit_params(k_H, 1, image_resolution_H,
                                    vision_patch_size_H, vision_width,
                                    vision_layers_H, embed_dim),
        "logit_scale": jnp.asarray(math.log(1.0 / 0.07), jnp.float32),
    }
    config = {
        "width": vision_width,
        "heads": vision_heads,
        "patch_mag": vision_patch_size_mag,
        "patch_H": vision_patch_size_H,
        "token_type": transformer_token_type,
    }

    B = 2
    image_mag = jax.random.normal(
        k_img1, (B, 1, image_resolution_mag, image_resolution_mag), jnp.float32)
    image_H = jax.random.normal(
        k_img2, (B, 1, image_resolution_H, image_resolution_H), jnp.float32)

    forward = jax.jit(functools.partial(solarclip_forward, config=config))
    logits_per_mag, logits_per_H, inner_cor = forward(params, image_mag, image_H)
    jax.block_until_ready((logits_per_mag, logits_per_H, inner_cor))

    assert logits_per_mag.shape == (B, B)
    assert logits_per_H.shape == (B, B)
    L_tokens = (image_resolution_mag // vision_patch_size_mag) ** 2
    assert inner_cor.shape == (B, L_tokens, L_tokens)
    assert bool(jnp.all(jnp.isfinite(logits_per_mag)))
    assert bool(jnp.all(jnp.isfinite(inner_cor)))
    print("KERNEL_OK")
</pallas_src>

<mosaic_0001>
module attributes {stable_mosaic.version = 11 : i64} {
  func.func @_linear_kernel(%arg0: i32, %arg1: i32, %arg2: memref<8x64xf32, #tpu.memory_space<vmem>>, %arg3: memref<64x64xbf16, #tpu.memory_space<vmem>>, %arg4: memref<8x64xf32, #tpu.memory_space<vmem>>) attributes {dimension_semantics = [#tpu.dimension_semantics<parallel>, #tpu.dimension_semantics<parallel>], iteration_bounds = array<i64: 1, 1>, scalar_prefetch = 0 : i64, scratch_operands = 0 : i64, tpu.core_type = #tpu.core_type<tc>, window_params = [{transform_indices = @transform_0, window_bounds = array<i64: 8, 64>}, {transform_indices = @transform_1, window_bounds = array<i64: 64, 64>}, {transform_indices = @transform_2, window_bounds = array<i64: 8, 64>}]} {
    %c0 = arith.constant 0 : index
    %c0_0 = arith.constant 0 : index
    %0 = vector.load %arg2[%c0, %c0_0] : memref<8x64xf32, #tpu.memory_space<vmem>>, vector<8x64xf32>
    %1 = arith.truncf %0 : vector<8x64xf32> to vector<8x64xbf16>
    %c0_1 = arith.constant 0 : index
    %c0_2 = arith.constant 0 : index
    %2 = vector.load %arg3[%c0_1, %c0_2] : memref<64x64xbf16, #tpu.memory_space<vmem>>, vector<64x64xbf16>
    %cst = arith.constant dense<0.000000e+00> : vector<8x64xf32>
    %3 = tpu.matmul %1, %2, %cst {dimension_numbers = #tpu.dot_dimension_numbers<[1], [0], [0], [1], [0, 0, 1, 1], [], []>} : vector<8x64xbf16>, vector<64x64xbf16>, vector<8x64xf32> -> vector<8x64xf32>
    %c0_3 = arith.constant 0 : index
    %c0_4 = arith.constant 0 : index
    %4 = vector.load %arg4[%c0_3, %c0_4] : memref<8x64xf32, #tpu.memory_space<vmem>>, vector<8x64xf32>
    tpu.vector_store %arg4[%c0_3, %c0_4], %3 {strides = array<i32>} : memref<8x64xf32, #tpu.memory_space<vmem>>, vector<8x64xf32>,
    return
  }
  func.func @transform_0(%arg0: i32, %arg1: i32) -> (i32, i32) {
    %c0_i32 = arith.constant 0 : i32
    %c0_i32_0 = arith.constant 0 : i32
    return %arg0, %c0_i32 : i32, i32
  }
  func.func @transform_1(%arg0: i32, %arg1: i32) -> (i32, i32) {
    %c0_i32 = arith.constant 0 : i32
    %c0_i32_0 = arith.constant 0 : i32
    return %c0_i32, %arg1 : i32, i32
  }
  func.func @transform_2(%arg0: i32, %arg1: i32) -> (i32, i32) {
    %c0_i32 = arith.constant 0 : i32
    return %arg0, %arg1 : i32, i32
  }
}

module attributes {stable_mosaic.version = 11 : i64} {
  func.func @_linear_kernel(%arg0: i32, %arg1: i32, %arg2: memref<10x64xf32, #tpu.memory_space<vmem>>, %arg3: memref<1x64xf32, #tpu.memory_space<vmem>>, %arg4: memref<1x64xf32, #tpu.memory_space<vmem>>, %arg5: memref<64x192xbf16, #tpu.memory_space<vmem>>, %arg6: memref<1x192xf32, #tpu.memory_space<vmem>>, %arg7: memref<10x192xf32, #tpu.memory_space<vmem>>) attributes {dimension_semantics = [#tpu.dimension_semantics<parallel>, #tpu.dimension_semantics<parallel>], iteration_bounds = array<i64: 1, 1>, scalar_prefetch = 0 : i64, scratch_operands = 0 : i64, tpu.core_type = #tpu.core_type<tc>, window_params = [{transform_indices = @transform_0, window_bounds = array<i64: 10, 64>}, {pipeline_mode = #tpu.pipeline_mode<synchronous>, transform_indices = @transform_1, window_bounds = array<i64: 1, 64>}, {pipeline_mode = #tpu.pipeline_mode<synchronous>, transform_indices = @transform_2, window_bounds = array<i64: 1, 64>}, {transform_indices = @transform_3, window_bounds = array<i64: 64, 192>}, {transform_indices = @transform_4, window_bounds = array<i64: 1, 192>}, {transform_indices = @transform_5, window_bounds = array<i64: 10, 192>}]} {
    %c0 = arith.constant 0 : index
    %c0_0 = arith.constant 0 : index
    %0 = vector.load %arg2[%c0, %c0_0] : memref<10x64xf32, #tpu.memory_space<vmem>>, vector<10x64xf32>
    %cst = arith.constant dense<0.000000e+00> : vector<10xf32>
    %1 = vector.multi_reduction <add>, %0, %cst [1] : vector<10x64xf32> to vector<10xf32>
    %2 = vector.shape_cast %1 : vector<10xf32> to vector<10x1xf32>
    %cst_1 = arith.constant 6.400000e+01 : f32
    %3 = vector.broadcast %cst_1 : f32 to vector<10x1xf32>
    %4 = arith.divf %2, %3 : vector<10x1xf32>
    %5 = vector.broadcast %4 : vector<10x1xf32> to vector<10x64xf32>
    %6 = arith.subf %0, %5 : vector<10x64xf32>
    %7 = arith.mulf %6, %6 : vector<10x64xf32>
    %cst_2 = arith.constant dense<0.000000e+00> : vector<10xf32>
    %8 = vector.multi_reduction <add>, %7, %cst_2 [1] : vector<10x64xf32> to vector<10xf32>
    %9 = vector.shape_cast %8 : vector<10xf32> to vector<10x1xf32>
    %cst_3 = arith.constant 6.400000e+01 : f32
    %10 = vector.broadcast %cst_3 : f32 to vector<10x1xf32>
    %11 = arith.divf %9, %10 : vector<10x1xf32>
    %12 = vector.broadcast %4 : vector<10x1xf32> to vector<10x64xf32>
    %13 = arith.subf %0, %12 : vector<10x64xf32>
    %cst_4 = arith.constant 9.99999974E-6 : f32
    %14 = vector.broadcast %cst_4 : f32 to vector<10x1xf32>
    %15 = arith.addf %11, %14 : vector<10x1xf32>
    %16 = math.rsqrt %15 : vector<10x1xf32>
    %17 = vector.broadcast %16 : vector<10x1xf32> to vector<10x64xf32>
    %18 = arith.mulf %13, %17 : vector<10x64xf32>
    %c0_5 = arith.constant 0 : index
    %c0_6 = arith.constant 0 : index
    %19 = vector.load %arg3[%c0_5, %c0_6] : memref<1x64xf32, #tpu.memory_space<vmem>>, vector<1x64xf32>
    %20 = vector.broadcast %19 : vector<1x64xf32> to vector<10x64xf32>
    %21 = arith.mulf %18, %20 : vector<10x64xf32>
    %c0_7 = arith.constant 0 : index
    %c0_8 = arith.constant 0 : index
    %22 = vector.load %arg4[%c0_7, %c0_8] : memref<1x64xf32, #tpu.memory_space<vmem>>, vector<1x64xf32>
    %23 = vector.broadcast %22 : vector<1x64xf32> to vector<10x64xf32>
    %24 = arith.addf %21, %23 : vector<10x64xf32>
    %25 = arith.truncf %24 : vector<10x64xf32> to vector<10x64xbf16>
    %c0_9 = arith.constant 0 : index
    %c0_10 = arith.constant 0 : index
    %26 = vector.load %arg5[%c0_9, %c0_10] : memref<64x192xbf16, #tpu.memory_space<vmem>>, vector<64x192xbf16>
    %cst_11 = arith.constant dense<0.000000e+00> : vector<10x192xf32>
    %27 = tpu.matmul %25, %26, %cst_11 {dimension_numbers = #tpu.dot_dimension_numbers<[1], [0], [0], [1], [0, 0, 1, 1], [], []>} : vector<10x64xbf16>, vector<64x192xbf16>, vector<10x192xf32> -> vector<10x192xf32>
    %c0_12 = arith.constant 0 : index
    %c0_13 = arith.constant 0 : index
    %28 = vector.load %arg6[%c0_12, %c0_13] : memref<1x192xf32, #tpu.memory_space<vmem>>, vector<1x192xf32>
    %29 = vector.broadcast %28 : vector<1x192xf32> to vector<10x192xf32>
    %30 = arith.addf %27, %29 : vector<10x192xf32>
    %c0_14 = arith.constant 0 : index
    %c0_15 = arith.constant 0 : index
    %31 = vector.load %arg7[%c0_14, %c0_15] : memref<10x192xf32, #tpu.memory_space<vmem>>, vector<10x192xf32>
    tpu.vector_store %arg7[%c0_14, %c0_15], %30 {strides = array<i32>} : memref<10x192xf32, #tpu.memory_space<vmem>>, vector<10x192xf32>,
    return
  }
  func.func @transform_0(%arg0: i32, %arg1: i32) -> (i32, i32) {
    %c0_i32 = arith.constant 0 : i32
    %c0_i32_0 = arith.constant 0 : i32
    return %arg0, %c0_i32 : i32, i32
  }
  func.func @transform_1(%arg0: i32, %arg1: i32) -> (i32, i32) {
    %c0_i32 = arith.constant 0 : i32
    %c0_i32_0 = arith.constant 0 : i32
    %c0_i32_1 = arith.constant 0 : i32
    return %c0_i32, %c0_i32_0 : i32, i32
  }
  func.func @transform_2(%arg0: i32, %arg1: i32) -> (i32, i32) {
    %c0_i32 = arith.constant 0 : i32
    %c0_i32_0 = arith.constant 0 : i32
    %c0_i32_1 = arith.constant 0 : i32
    return %c0_i32, %c0_i32_0 : i32, i32
  }
  func.func @transform_3(%arg0: i32, %arg1: i32) -> (i32, i32) {
    %c0_i32 = arith.constant 0 : i32
    %c0_i32_0 = arith.constant 0 : i32
    return %c0_i32, %arg1 : i32, i32
  }
  func.func @transform_4(%arg0: i32, %arg1: i32) -> (i32, i32) {
    %c0_i32 = arith.constant 0 : i32
    %c0_i32_0 = arith.constant 0 : i32
    return %c0_i32, %arg1 : i32, i32
  }
  func.func @transform_5(%arg0: i32, %arg1: i32) -> (i32, i32) {
    %c0_i32 = arith.constant 0 : i32
    return %arg0, %arg1 : i32, i32
  }
}

module attributes {stable_mosaic.version = 11 : i64} {
  func.func @_layernorm_kernel(%arg0: i32, %arg1: memref<10x64xf32, #tpu.memory_space<vmem>>, %arg2: memref<1x64xf32, #tpu.memory_space<vmem>>, %arg3: memref<1x64xf32, #tpu.memory_space<vmem>>, %arg4: memref<10x64xf32, #tpu.memory_space<vmem>>) attributes {dimension_semantics = [#tpu.dimension_semantics<parallel>], iteration_bounds = array<i64: 1>, scalar_prefetch = 0 : i64, scratch_operands = 0 : i64, tpu.core_type = #tpu.core_type<tc>, window_params = [{transform_indices = @transform_0, window_bounds = array<i64: 10, 64>}, {pipeline_mode = #tpu.pipeline_mode<synchronous>, transform_indices = @transform_1, window_bounds = array<i64: 1, 64>}, {pipeline_mode = #tpu.pipeline_mode<synchronous>, transform_indices = @transform_2, window_bounds = array<i64: 1, 64>}, {transform_indices = @transform_3, window_bounds = array<i64: 10, 64>}]} {
    %c0 = arith.constant 0 : index
    %c0_0 = arith.constant 0 : index
    %0 = vector.load %arg1[%c0, %c0_0] : memref<10x64xf32, #tpu.memory_space<vmem>>, vector<10x64xf32>
    %cst = arith.constant dense<0.000000e+00> : vector<10xf32>
    %1 = vector.multi_reduction <add>, %0, %cst [1] : vector<10x64xf32> to vector<10xf32>
    %2 = vector.shape_cast %1 : vector<10xf32> to vector<10x1xf32>
    %cst_1 = arith.constant 6.400000e+01 : f32
    %3 = vector.broadcast %cst_1 : f32 to vector<10x1xf32>
    %4 = arith.divf %2, %3 : vector<10x1xf32>
    %5 = vector.broadcast %4 : vector<10x1xf32> to vector<10x64xf32>
    %6 = arith.subf %0, %5 : vector<10x64xf32>
    %7 = arith.mulf %6, %6 : vector<10x64xf32>
    %cst_2 = arith.constant dense<0.000000e+00> : vector<10xf32>
    %8 = vector.multi_reduction <add>, %7, %cst_2 [1] : vector<10x64xf32> to vector<10xf32>
    %9 = vector.shape_cast %8 : vector<10xf32> to vector<10x1xf32>
    %cst_3 = arith.constant 6.400000e+01 : f32
    %10 = vector.broadcast %cst_3 : f32 to vector<10x1xf32>
    %11 = arith.divf %9, %10 : vector<10x1xf32>
    %12 = vector.broadcast %4 : vector<10x1xf32> to vector<10x64xf32>
    %13 = arith.subf %0, %12 : vector<10x64xf32>
    %cst_4 = arith.constant 9.99999974E-6 : f32
    %14 = vector.broadcast %cst_4 : f32 to vector<10x1xf32>
    %15 = arith.addf %11, %14 : vector<10x1xf32>
    %16 = math.rsqrt %15 : vector<10x1xf32>
    %17 = vector.broadcast %16 : vector<10x1xf32> to vector<10x64xf32>
    %18 = arith.mulf %13, %17 : vector<10x64xf32>
    %c0_5 = arith.constant 0 : index
    %c0_6 = arith.constant 0 : index
    %19 = vector.load %arg2[%c0_5, %c0_6] : memref<1x64xf32, #tpu.memory_space<vmem>>, vector<1x64xf32>
    %20 = vector.broadcast %19 : vector<1x64xf32> to vector<10x64xf32>
    %21 = arith.mulf %18, %20 : vector<10x64xf32>
    %c0_7 = arith.constant 0 : index
    %c0_8 = arith.constant 0 : index
    %22 = vector.load %arg3[%c0_7, %c0_8] : memref<1x64xf32, #tpu.memory_space<vmem>>, vector<1x64xf32>
    %23 = vector.broadcast %22 : vector<1x64xf32> to vector<10x64xf32>
    %24 = arith.addf %21, %23 : vector<10x64xf32>
    %c0_9 = arith.constant 0 : index
    %c0_10 = arith.constant 0 : index
    %25 = vector.load %arg4[%c0_9, %c0_10] : memref<10x64xf32, #tpu.memory_space<vmem>>, vector<10x64xf32>
    tpu.vector_store %arg4[%c0_9, %c0_10], %24 {strides = array<i32>} : memref<10x64xf32, #tpu.memory_space<vmem>>, vector<10x64xf32>,
    return
  }
  func.func @transform_0(%arg0: i32) -> (i32, i32) {
    %c0_i32 = arith.constant 0 : i32
    %c0_i32_0 = arith.constant 0 : i32
    return %arg0, %c0_i32 : i32, i32
  }
  func.func @transform_1(%arg0: i32) -> (i32, i32) {
    %c0_i32 = arith.constant 0 : i32
    %c0_i32_0 = arith.constant 0 : i32
    %c0_i32_1 = arith.constant 0 : i32
    return %c0_i32, %c0_i32_0 : i32, i32
  }
  func.func @transform_2(%arg0: i32) -> (i32, i32) {
    %c0_i32 = arith.constant 0 : i32
    %c0_i32_0 = arith.constant 0 : i32
    %c0_i32_1 = arith.constant 0 : i32
    return %c0_i32, %c0_i32_0 : i32, i32
  }
  func.func @transform_3(%arg0: i32) -> (i32, i32) {
    %c0_i32 = arith.constant 0 : i32
    %c0_i32_0 = arith.constant 0 : i32
    return %arg0, %c0_i32 : i32, i32
  }
}

module attributes {stable_mosaic.version = 11 : i64} {
  func.func @_attn_block_kernel(%arg0: i32, %arg1: memref<1x5x192xf32, #tpu.memory_space<vmem>>, %arg2: memref<1x5x64xf32, #tpu.memory_space<vmem>>, %arg3: memref<64x64xbf16, #tpu.memory_space<vmem>>, %arg4: memref<1x64xf32, #tpu.memory_space<vmem>>, %arg5: memref<1x5x64xf32, #tpu.memory_space<vmem>>) attributes {dimension_semantics = [#tpu.dimension_semantics<parallel>], iteration_bounds = array<i64: 2>, scalar_prefetch = 0 : i64, scratch_operands = 0 : i64, tpu.core_type = #tpu.core_type<tc>, window_params = [{transform_indices = @transform_0, window_bounds = array<i64: 1, 5, 192>}, {transform_indices = @transform_1, window_bounds = array<i64: 1, 5, 64>}, {pipeline_mode = #tpu.pipeline_mode<synchronous>, transform_indices = @transform_2, window_bounds = array<i64: 64, 64>}, {pipeline_mode = #tpu.pipeline_mode<synchronous>, transform_indices = @transform_3, window_bounds = array<i64: 1, 64>}, {transform_indices = @transform_4, window_bounds = array<i64: 1, 5, 64>}]} {
    %c0 = arith.constant 0 : index
    %c0_0 = arith.constant 0 : index
    %c0_1 = arith.constant 0 : index
    %0 = vector.load %arg1[%c0, %c0_0, %c0_1] : memref<1x5x192xf32, #tpu.memory_space<vmem>>, vector<1x5x192xf32>
    %1 = vector.shape_cast %0 : vector<1x5x192xf32> to vector<5x192xf32>
    %2 = vector.extract_strided_slice %1 {offsets = [0, 0], sizes = [5, 64], strides = [1, 1]} : vector<5x192xf32> to vector<5x64xf32>
    %3 = arith.truncf %2 : vector<5x64xf32> to vector<5x64xbf16>
    %4 = vector.extract_strided_slice %1 {offsets = [0, 64], sizes = [5, 64], strides = [1, 1]} : vector<5x192xf32> to vector<5x64xf32>
    %5 = arith.truncf %4 : vector<5x64xf32> to vector<5x64xbf16>
    %6 = vector.extract_strided_slice %1 {offsets = [0, 128], sizes = [5, 64], strides = [1, 1]} : vector<5x192xf32> to vector<5x64xf32>
    %7 = arith.truncf %6 : vector<5x64xf32> to vector<5x64xbf16>
    %cst = arith.constant dense<0.000000e+00> : vector<5x5xf32>
    %8 = tpu.matmul %3, %5, %cst {dimension_numbers = #tpu.dot_dimension_numbers<[1], [1], [0], [0], [0, 0, 1, 0], [], []>} : vector<5x64xbf16>, vector<5x64xbf16>, vector<5x5xf32> -> vector<5x5xf32>
    %cst_2 = arith.constant 1.250000e-01 : f32
    %9 = vector.broadcast %cst_2 : f32 to vector<5x5xf32>
    %10 = arith.mulf %8, %9 : vector<5x5xf32>
    %cst_3 = arith.constant dense<0xFF800000> : vector<5xf32>
    %11 = vector.multi_reduction <maximumf>, %10, %cst_3 [1] : vector<5x5xf32> to vector<5xf32>
    %12 = vector.shape_cast %11 : vector<5xf32> to vector<5x1xf32>
    %13 = vector.broadcast %12 : vector<5x1xf32> to vector<5x5xf32>
    %14 = arith.subf %10, %13 : vector<5x5xf32>
    %15 = math.exp %14 : vector<5x5xf32>
    %cst_4 = arith.constant dense<0.000000e+00> : vector<5xf32>
    %16 = vector.multi_reduction <add>, %15, %cst_4 [1] : vector<5x5xf32> to vector<5xf32>
    %17 = vector.shape_cast %16 : vector<5xf32> to vector<5x1xf32>
    %18 = vector.broadcast %17 : vector<5x1xf32> to vector<5x5xf32>
    %19 = arith.divf %15, %18 : vector<5x5xf32>
    %20 = arith.truncf %19 : vector<5x5xf32> to vector<5x5xbf16>
    %cst_5 = arith.constant dense<0.000000e+00> : vector<5x64xf32>
    %21 = tpu.matmul %20, %7, %cst_5 {dimension_numbers = #tpu.dot_dimension_numbers<[1], [0], [0], [1], [0, 0, 1, 1], [], []>} : vector<5x5xbf16>, vector<5x64xbf16>, vector<5x64xf32> -> vector<5x64xf32>
    %22 = arith.truncf %21 : vector<5x64xf32> to vector<5x64xbf16>
    %c0_6 = arith.constant 0 : index
    %c0_7 = arith.constant 0 : index
    %23 = vector.load %arg3[%c0_6, %c0_7] : memref<64x64xbf16, #tpu.memory_space<vmem>>, vector<64x64xbf16>
    %cst_8 = arith.constant dense<0.000000e+00> : vector<5x64xf32>
    %24 = tpu.matmul %22, %23, %cst_8 {dimension_numbers = #tpu.dot_dimension_numbers<[1], [0], [0], [1], [0, 0, 1, 1], [], []>} : vector<5x64xbf16>, vector<64x64xbf16>, vector<5x64xf32> -> vector<5x64xf32>
    %c0_9 = arith.constant 0 : index
    %c0_10 = arith.constant 0 : index
    %25 = vector.load %arg4[%c0_9, %c0_10] : memref<1x64xf32, #tpu.memory_space<vmem>>, vector<1x64xf32>
    %26 = vector.broadcast %25 : vector<1x64xf32> to vector<5x64xf32>
    %27 = arith.addf %24, %26 : vector<5x64xf32>
    %c0_11 = arith.constant 0 : index
    %c0_12 = arith.constant 0 : index
    %c0_13 = arith.constant 0 : index
    %28 = vector.load %arg2[%c0_11, %c0_12, %c0_13] : memref<1x5x64xf32, #tpu.memory_space<vmem>>, vector<1x5x64xf32>
    %29 = vector.shape_cast %28 : vector<1x5x64xf32> to vector<5x64xf32>
    %30 = arith.addf %29, %27 : vector<5x64xf32>
    %c0_14 = arith.constant 0 : index
    %c0_15 = arith.constant 0 : index
    %c0_16 = arith.constant 0 : index
    %31 = vector.load %arg5[%c0_14, %c0_15, %c0_16] : memref<1x5x64xf32, #tpu.memory_space<vmem>>, vector<1x5x64xf32>
    %32 = vector.shape_cast %31 : vector<1x5x64xf32> to vector<5x64xf32>
    %33 = vector.shape_cast %30 : vector<5x64xf32> to vector<1x5x64xf32>
    tpu.vector_store %arg5[%c0_14, %c0_15, %c0_16], %33 {strides = array<i32>} : memref<1x5x64xf32, #tpu.memory_space<vmem>>, vector<1x5x64xf32>,
    return
  }
  func.func @transform_0(%arg0: i32) -> (i32, i32, i32) {
    %c0_i32 = arith.constant 0 : i32
    %c0_i32_0 = arith.constant 0 : i32
    %c0_i32_1 = arith.constant 0 : i32
    return %arg0, %c0_i32, %c0_i32_0 : i32, i32, i32
  }
  func.func @transform_1(%arg0: i32) -> (i32, i32, i32) {
    %c0_i32 = arith.constant 0 : i32
    %c0_i32_0 = arith.constant 0 : i32
    %c0_i32_1 = arith.constant 0 : i32
    return %arg0, %c0_i32, %c0_i32_0 : i32, i32, i32
  }
  func.func @transform_2(%arg0: i32) -> (i32, i32) {
    %c0_i32 = arith.constant 0 : i32
    %c0_i32_0 = arith.constant 0 : i32
    %c0_i32_1 = arith.constant 0 : i32
    return %c0_i32, %c0_i32_0 : i32, i32
  }
  func.func @transform_3(%arg0: i32) -> (i32, i32) {
    %c0_i32 = arith.constant 0 : i32
    %c0_i32_0 = arith.constant 0 : i32
    %c0_i32_1 = arith.constant 0 : i32
    return %c0_i32, %c0_i32_0 : i32, i32
  }
  func.func @transform_4(%arg0: i32) -> (i32, i32, i32) {
    %c0_i32 = arith.constant 0 : i32
    %c0_i32_0 = arith.constant 0 : i32
    %c0_i32_1 = arith.constant 0 : i32
    return %arg0, %c0_i32, %c0_i32_0 : i32, i32, i32
  }
}

module attributes {stable_mosaic.version = 11 : i64} {
  func.func @_linear_kernel(%arg0: i32, %arg1: i32, %arg2: memref<10x64xf32, #tpu.memory_space<vmem>>, %arg3: memref<1x64xf32, #tpu.memory_space<vmem>>, %arg4: memref<1x64xf32, #tpu.memory_space<vmem>>, %arg5: memref<64x256xbf16, #tpu.memory_space<vmem>>, %arg6: memref<1x256xf32, #tpu.memory_space<vmem>>, %arg7: memref<10x256xf32, #tpu.memory_space<vmem>>) attributes {dimension_semantics = [#tpu.dimension_semantics<parallel>, #tpu.dimension_semantics<parallel>], iteration_bounds = array<i64: 1, 1>, scalar_prefetch = 0 : i64, scratch_operands = 0 : i64, tpu.core_type = #tpu.core_type<tc>, window_params = [{transform_indices = @transform_0, window_bounds = array<i64: 10, 64>}, {pipeline_mode = #tpu.pipeline_mode<synchronous>, transform_indices = @transform_1, window_bounds = array<i64: 1, 64>}, {pipeline_mode = #tpu.pipeline_mode<synchronous>, transform_indices = @transform_2, window_bounds = array<i64: 1, 64>}, {transform_indices = @transform_3, window_bounds = array<i64: 64, 256>}, {transform_indices = @transform_4, window_bounds = array<i64: 1, 256>}, {transform_indices = @transform_5, window_bounds = array<i64: 10, 256>}]} {
    %c0 = arith.constant 0 : index
    %c0_0 = arith.constant 0 : index
    %0 = vector.load %arg2[%c0, %c0_0] : memref<10x64xf32, #tpu.memory_space<vmem>>, vector<10x64xf32>
    %cst = arith.constant dense<0.000000e+00> : vector<10xf32>
    %1 = vector.multi_reduction <add>, %0, %cst [1] : vector<10x64xf32> to vector<10xf32>
    %2 = vector.shape_cast %1 : vector<10xf32> to vector<10x1xf32>
    %cst_1 = arith.constant 6.400000e+01 : f32
    %3 = vector.broadcast %cst_1 : f32 to vector<10x1xf32>
    %4 = arith.divf %2, %3 : vector<10x1xf32>
    %5 = vector.broadcast %4 : vector<10x1xf32> to vector<10x64xf32>
    %6 = arith.subf %0, %5 : vector<10x64xf32>
    %7 = arith.mulf %6, %6 : vector<10x64xf32>
    %cst_2 = arith.constant dense<0.000000e+00> : vector<10xf32>
    %8 = vector.multi_reduction <add>, %7, %cst_2 [1] : vector<10x64xf32> to vector<10xf32>
    %9 = vector.shape_cast %8 : vector<10xf32> to vector<10x1xf32>
    %cst_3 = arith.constant 6.400000e+01 : f32
    %10 = vector.broadcast %cst_3 : f32 to vector<10x1xf32>
    %11 = arith.divf %9, %10 : vector<10x1xf32>
    %12 = vector.broadcast %4 : vector<10x1xf32> to vector<10x64xf32>
    %13 = arith.subf %0, %12 : vector<10x64xf32>
    %cst_4 = arith.constant 9.99999974E-6 : f32
    %14 = vector.broadcast %cst_4 : f32 to vector<10x1xf32>
    %15 = arith.addf %11, %14 : vector<10x1xf32>
    %16 = math.rsqrt %15 : vector<10x1xf32>
    %17 = vector.broadcast %16 : vector<10x1xf32> to vector<10x64xf32>
    %18 = arith.mulf %13, %17 : vector<10x64xf32>
    %c0_5 = arith.constant 0 : index
    %c0_6 = arith.constant 0 : index
    %19 = vector.load %arg3[%c0_5, %c0_6] : memref<1x64xf32, #tpu.memory_space<vmem>>, vector<1x64xf32>
    %20 = vector.broadcast %19 : vector<1x64xf32> to vector<10x64xf32>
    %21 = arith.mulf %18, %20 : vector<10x64xf32>
    %c0_7 = arith.constant 0 : index
    %c0_8 = arith.constant 0 : index
    %22 = vector.load %arg4[%c0_7, %c0_8] : memref<1x64xf32, #tpu.memory_space<vmem>>, vector<1x64xf32>
    %23 = vector.broadcast %22 : vector<1x64xf32> to vector<10x64xf32>
    %24 = arith.addf %21, %23 : vector<10x64xf32>
    %25 = arith.truncf %24 : vector<10x64xf32> to vector<10x64xbf16>
    %c0_9 = arith.constant 0 : index
    %c0_10 = arith.constant 0 : index
    %26 = vector.load %arg5[%c0_9, %c0_10] : memref<64x256xbf16, #tpu.memory_space<vmem>>, vector<64x256xbf16>
    %cst_11 = arith.constant dense<0.000000e+00> : vector<10x256xf32>
    %27 = tpu.matmul %25, %26, %cst_11 {dimension_numbers = #tpu.dot_dimension_numbers<[1], [0], [0], [1], [0, 0, 1, 1], [], []>} : vector<10x64xbf16>, vector<64x256xbf16>, vector<10x256xf32> -> vector<10x256xf32>
    %c0_12 = arith.constant 0 : index
    %c0_13 = arith.constant 0 : index
    %28 = vector.load %arg6[%c0_12, %c0_13] : memref<1x256xf32, #tpu.memory_space<vmem>>, vector<1x256xf32>
    %29 = vector.broadcast %28 : vector<1x256xf32> to vector<10x256xf32>
    %30 = arith.addf %27, %29 : vector<10x256xf32>
    %cst_14 = arith.constant 1.702000e+00 : f32
    %31 = vector.broadcast %cst_14 : f32 to vector<10x256xf32>
    %32 = arith.mulf %31, %30 : vector<10x256xf32>
    %33 = arith.negf %32 : vector<10x256xf32>
    %34 = math.exp %33 : vector<10x256xf32>
    %cst_15 = arith.constant 1.000000e+00 : f32
    %35 = vector.broadcast %cst_15 : f32 to vector<10x256xf32>
    %36 = arith.addf %35, %34 : vector<10x256xf32>
    %37 = arith.divf %35, %36 : vector<10x256xf32>
    %38 = arith.mulf %30, %37 : vector<10x256xf32>
    %c0_16 = arith.constant 0 : index
    %c0_17 = arith.constant 0 : index
    %39 = vector.load %arg7[%c0_16, %c0_17] : memref<10x256xf32, #tpu.memory_space<vmem>>, vector<10x256xf32>
    tpu.vector_store %arg7[%c0_16, %c0_17], %38 {strides = array<i32>} : memref<10x256xf32, #tpu.memory_space<vmem>>, vector<10x256xf32>,
    return
  }
  func.func @transform_0(%arg0: i32, %arg1: i32) -> (i32, i32) {
    %c0_i32 = arith.constant 0 : i32
    %c0_i32_0 = arith.constant 0 : i32
    return %arg0, %c0_i32 : i32, i32
  }
  func.func @transform_1(%arg0: i32, %arg1: i32) -> (i32, i32) {
    %c0_i32 = arith.constant 0 : i32
    %c0_i32_0 = arith.constant 0 : i32
    %c0_i32_1 = arith.constant 0 : i32
    return %c0_i32, %c0_i32_0 : i32, i32
  }
  func.func @transform_2(%arg0: i32, %arg1: i32) -> (i32, i32) {
    %c0_i32 = arith.constant 0 : i32
    %c0_i32_0 = arith.constant 0 : i32
    %c0_i32_1 = arith.constant 0 : i32
    return %c0_i32, %c0_i32_0 : i32, i32
  }
  func.func @transform_3(%arg0: i32, %arg1: i32) -> (i32, i32) {
    %c0_i32 = arith.constant 0 : i32
    %c0_i32_0 = arith.constant 0 : i32
    return %c0_i32, %arg1 : i32, i32
  }
  func.func @transform_4(%arg0: i32, %arg1: i32) -> (i32, i32) {
    %c0_i32 = arith.constant 0 : i32
    %c0_i32_0 = arith.constant 0 : i32
    return %c0_i32, %arg1 : i32, i32
  }
  func.func @transform_5(%arg0: i32, %arg1: i32) -> (i32, i32) {
    %c0_i32 = arith.constant 0 : i32
    return %arg0, %arg1 : i32, i32
  }
}

module attributes {stable_mosaic.version = 11 : i64} {
  func.func @_linear_kernel(%arg0: i32, %arg1: i32, %arg2: memref<10x256xf32, #tpu.memory_space<vmem>>, %arg3: memref<256x64xbf16, #tpu.memory_space<vmem>>, %arg4: memref<1x64xf32, #tpu.memory_space<vmem>>, %arg5: memref<10x64xf32, #tpu.memory_space<vmem>>, %arg6: memref<10x64xf32, #tpu.memory_space<vmem>>) attributes {dimension_semantics = [#tpu.dimension_semantics<parallel>, #tpu.dimension_semantics<parallel>], iteration_bounds = array<i64: 1, 1>, scalar_prefetch = 0 : i64, scratch_operands = 0 : i64, tpu.core_type = #tpu.core_type<tc>, window_params = [{transform_indices = @transform_0, window_bounds = array<i64: 10, 256>}, {transform_indices = @transform_1, window_bounds = array<i64: 256, 64>}, {transform_indices = @transform_2, window_bounds = array<i64: 1, 64>}, {transform_indices = @transform_3, window_bounds = array<i64: 10, 64>}, {transform_indices = @transform_4, window_bounds = array<i64: 10, 64>}]} {
    %c0 = arith.constant 0 : index
    %c0_0 = arith.constant 0 : index
    %0 = vector.load %arg2[%c0, %c0_0] : memref<10x256xf32, #tpu.memory_space<vmem>>, vector<10x256xf32>
    %1 = arith.truncf %0 : vector<10x256xf32> to vector<10x256xbf16>
    %c0_1 = arith.constant 0 : index
    %c0_2 = arith.constant 0 : index
    %2 = vector.load %arg3[%c0_1, %c0_2] : memref<256x64xbf16, #tpu.memory_space<vmem>>, vector<256x64xbf16>
    %cst = arith.constant dense<0.000000e+00> : vector<10x64xf32>
    %3 = tpu.matmul %1, %2, %cst {dimension_numbers = #tpu.dot_dimension_numbers<[1], [0], [0], [1], [0, 0, 1, 1], [], []>} : vector<10x256xbf16>, vector<256x64xbf16>, vector<10x64xf32> -> vector<10x64xf32>
    %c0_3 = arith.constant 0 : index
    %c0_4 = arith.constant 0 : index
    %4 = vector.load %arg4[%c0_3, %c0_4] : memref<1x64xf32, #tpu.memory_space<vmem>>, vector<1x64xf32>
    %5 = vector.broadcast %4 : vector<1x64xf32> to vector<10x64xf32>
    %6 = arith.addf %3, %5 : vector<10x64xf32>
    %c0_5 = arith.constant 0 : index
    %c0_6 = arith.constant 0 : index
    %7 = vector.load %arg5[%c0_5, %c0_6] : memref<10x64xf32, #tpu.memory_space<vmem>>, vector<10x64xf32>
    %8 = arith.addf %6, %7 : vector<10x64xf32>
    %c0_7 = arith.constant 0 : index
    %c0_8 = arith.constant 0 : index
    %9 = vector.load %arg6[%c0_7, %c0_8] : memref<10x64xf32, #tpu.memory_space<vmem>>, vector<10x64xf32>
    tpu.vector_store %arg6[%c0_7, %c0_8], %8 {strides = array<i32>} : memref<10x64xf32, #tpu.memory_space<vmem>>, vector<10x64xf32>,
    return
  }
  func.func @transform_0(%arg0: i32, %arg1: i32) -> (i32, i32) {
    %c0_i32 = arith.constant 0 : i32
    %c0_i32_0 = arith.constant 0 : i32
    return %arg0, %c0_i32 : i32, i32
  }
  func.func @transform_1(%arg0: i32, %arg1: i32) -> (i32, i32) {
    %c0_i32 = arith.constant 0 : i32
    %c0_i32_0 = arith.constant 0 : i32
    return %c0_i32, %arg1 : i32, i32
  }
  func.func @transform_2(%arg0: i32, %arg1: i32) -> (i32, i32) {
    %c0_i32 = arith.constant 0 : i32
    %c0_i32_0 = arith.constant 0 : i32
    return %c0_i32, %arg1 : i32, i32
  }
  func.func @transform_3(%arg0: i32, %arg1: i32) -> (i32, i32) {
    %c0_i32 = arith.constant 0 : i32
    return %arg0, %arg1 : i32, i32
  }
  func.func @transform_4(%arg0: i32, %arg1: i32) -> (i32, i32) {
    %c0_i32 = arith.constant 0 : i32
    return %arg0, %arg1 : i32, i32
  }
}

module attributes {stable_mosaic.version = 11 : i64} {
  func.func @_l2norm_weight_kernel(%arg0: i32, %arg1: memref<8x32xf32, #tpu.memory_space<vmem>>, %arg2: memref<8x1xf32, #tpu.memory_space<vmem>>, %arg3: memref<8x32xf32, #tpu.memory_space<vmem>>) attributes {dimension_semantics = [#tpu.dimension_semantics<parallel>], iteration_bounds = array<i64: 1>, scalar_prefetch = 0 : i64, scratch_operands = 0 : i64, tpu.core_type = #tpu.core_type<tc>, window_params = [{transform_indices = @transform_0, window_bounds = array<i64: 8, 32>}, {transform_indices = @transform_1, window_bounds = array<i64: 8, 1>}, {transform_indices = @transform_2, window_bounds = array<i64: 8, 32>}]} {
    %c0 = arith.constant 0 : index
    %c0_0 = arith.constant 0 : index
    %0 = vector.load %arg1[%c0, %c0_0] : memref<8x32xf32, #tpu.memory_space<vmem>>, vector<8x32xf32>
    %1 = arith.mulf %0, %0 : vector<8x32xf32>
    %cst = arith.constant dense<0.000000e+00> : vector<8xf32>
    %2 = vector.multi_reduction <add>, %1, %cst [1] : vector<8x32xf32> to vector<8xf32>
    %3 = vector.shape_cast %2 : vector<8xf32> to vector<8x1xf32>
    %4 = math.sqrt %3 : vector<8x1xf32>
    %cst_1 = arith.constant 1.000000e-32 : f32
    %5 = vector.broadcast %cst_1 : f32 to vector<8x1xf32>
    %6 = arith.addf %4, %5 : vector<8x1xf32>
    %7 = vector.broadcast %6 : vector<8x1xf32> to vector<8x32xf32>
    %8 = arith.divf %0, %7 : vector<8x32xf32>
    %c0_2 = arith.constant 0 : index
    %c0_3 = arith.constant 0 : index
    %9 = vector.load %arg2[%c0_2, %c0_3] : memref<8x1xf32, #tpu.memory_space<vmem>>, vector<8x1xf32>
    %10 = vector.broadcast %9 : vector<8x1xf32> to vector<8x32xf32>
    %11 = arith.mulf %8, %10 : vector<8x32xf32>
    %c0_4 = arith.constant 0 : index
    %c0_5 = arith.constant 0 : index
    %12 = vector.load %arg3[%c0_4, %c0_5] : memref<8x32xf32, #tpu.memory_space<vmem>>, vector<8x32xf32>
    tpu.vector_store %arg3[%c0_4, %c0_5], %11 {strides = array<i32>} : memref<8x32xf32, #tpu.memory_space<vmem>>, vector<8x32xf32>,
    return
  }
  func.func @transform_0(%arg0: i32) -> (i32, i32) {
    %c0_i32 = arith.constant 0 : i32
    %c0_i32_0 = arith.constant 0 : i32
    return %arg0, %c0_i32 : i32, i32
  }
  func.func @transform_1(%arg0: i32) -> (i32, i32) {
    %c0_i32 = arith.constant 0 : i32
    %c0_i32_0 = arith.constant 0 : i32
    return %arg0, %c0_i32 : i32, i32
  }
  func.func @transform_2(%arg0: i32) -> (i32, i32) {
    %c0_i32 = arith.constant 0 : i32
    %c0_i32_0 = arith.constant 0 : i32
    return %arg0, %c0_i32 : i32, i32
  }
}

module attributes {stable_mosaic.version = 11 : i64} {
  func.func @_linear_kernel(%arg0: i32, %arg1: i32, %arg2: memref<8x64xf32, #tpu.memory_space<vmem>>, %arg3: memref<1x64xf32, #tpu.memory_space<vmem>>, %arg4: memref<1x64xf32, #tpu.memory_space<vmem>>, %arg5: memref<64x32xbf16, #tpu.memory_space<vmem>>, %arg6: memref<8x32xf32, #tpu.memory_space<vmem>>) attributes {dimension_semantics = [#tpu.dimension_semantics<parallel>, #tpu.dimension_semantics<parallel>], iteration_bounds = array<i64: 1, 1>, scalar_prefetch = 0 : i64, scratch_operands = 0 : i64, tpu.core_type = #tpu.core_type<tc>, window_params = [{transform_indices = @transform_0, window_bounds = array<i64: 8, 64>}, {pipeline_mode = #tpu.pipeline_mode<synchronous>, transform_indices = @transform_1, window_bounds = array<i64: 1, 64>}, {pipeline_mode = #tpu.pipeline_mode<synchronous>, transform_indices = @transform_2, window_bounds = array<i64: 1, 64>}, {transform_indices = @transform_3, window_bounds = array<i64: 64, 32>}, {transform_indices = @transform_4, window_bounds = array<i64: 8, 32>}]} {
    %c0 = arith.constant 0 : index
    %c0_0 = arith.constant 0 : index
    %0 = vector.load %arg2[%c0, %c0_0] : memref<8x64xf32, #tpu.memory_space<vmem>>, vector<8x64xf32>
    %cst = arith.constant dense<0.000000e+00> : vector<8xf32>
    %1 = vector.multi_reduction <add>, %0, %cst [1] : vector<8x64xf32> to vector<8xf32>
    %2 = vector.shape_cast %1 : vector<8xf32> to vector<8x1xf32>
    %cst_1 = arith.constant 6.400000e+01 : f32
    %3 = vector.broadcast %cst_1 : f32 to vector<8x1xf32>
    %4 = arith.divf %2, %3 : vector<8x1xf32>
    %5 = vector.broadcast %4 : vector<8x1xf32> to vector<8x64xf32>
    %6 = arith.subf %0, %5 : vector<8x64xf32>
    %7 = arith.mulf %6, %6 : vector<8x64xf32>
    %cst_2 = arith.constant dense<0.000000e+00> : vector<8xf32>
    %8 = vector.multi_reduction <add>, %7, %cst_2 [1] : vector<8x64xf32> to vector<8xf32>
    %9 = vector.shape_cast %8 : vector<8xf32> to vector<8x1xf32>
    %cst_3 = arith.constant 6.400000e+01 : f32
    %10 = vector.broadcast %cst_3 : f32 to vector<8x1xf32>
    %11 = arith.divf %9, %10 : vector<8x1xf32>
    %12 = vector.broadcast %4 : vector<8x1xf32> to vector<8x64xf32>
    %13 = arith.subf %0, %12 : vector<8x64xf32>
    %cst_4 = arith.constant 9.99999974E-6 : f32
    %14 = vector.broadcast %cst_4 : f32 to vector<8x1xf32>
    %15 = arith.addf %11, %14 : vector<8x1xf32>
    %16 = math.rsqrt %15 : vector<8x1xf32>
    %17 = vector.broadcast %16 : vector<8x1xf32> to vector<8x64xf32>
    %18 = arith.mulf %13, %17 : vector<8x64xf32>
    %c0_5 = arith.constant 0 : index
    %c0_6 = arith.constant 0 : index
    %19 = vector.load %arg3[%c0_5, %c0_6] : memref<1x64xf32, #tpu.memory_space<vmem>>, vector<1x64xf32>
    %20 = vector.broadcast %19 : vector<1x64xf32> to vector<8x64xf32>
    %21 = arith.mulf %18, %20 : vector<8x64xf32>
    %c0_7 = arith.constant 0 : index
    %c0_8 = arith.constant 0 : index
    %22 = vector.load %arg4[%c0_7, %c0_8] : memref<1x64xf32, #tpu.memory_space<vmem>>, vector<1x64xf32>
    %23 = vector.broadcast %22 : vector<1x64xf32> to vector<8x64xf32>
    %24 = arith.addf %21, %23 : vector<8x64xf32>
    %25 = arith.truncf %24 : vector<8x64xf32> to vector<8x64xbf16>
    %c0_9 = arith.constant 0 : index
    %c0_10 = arith.constant 0 : index
    %26 = vector.load %arg5[%c0_9, %c0_10] : memref<64x32xbf16, #tpu.memory_space<vmem>>, vector<64x32xbf16>
    %cst_11 = arith.constant dense<0.000000e+00> : vector<8x32xf32>
    %27 = tpu.matmul %25, %26, %cst_11 {dimension_numbers = #tpu.dot_dimension_numbers<[1], [0], [0], [1], [0, 0, 1, 1], [], []>} : vector<8x64xbf16>, vector<64x32xbf16>, vector<8x32xf32> -> vector<8x32xf32>
    %c0_12 = arith.constant 0 : index
    %c0_13 = arith.constant 0 : index
    %28 = vector.load %arg6[%c0_12, %c0_13] : memref<8x32xf32, #tpu.memory_space<vmem>>, vector<8x32xf32>
    tpu.vector_store %arg6[%c0_12, %c0_13], %27 {strides = array<i32>} : memref<8x32xf32, #tpu.memory_space<vmem>>, vector<8x32xf32>,
    return
  }
  func.func @transform_0(%arg0: i32, %arg1: i32) -> (i32, i32) {
    %c0_i32 = arith.constant 0 : i32
    %c0_i32_0 = arith.constant 0 : i32
    return %arg0, %c0_i32 : i32, i32
  }
  func.func @transform_1(%arg0: i32, %arg1: i32) -> (i32, i32) {
    %c0_i32 = arith.constant 0 : i32
    %c0_i32_0 = arith.constant 0 : i32
    %c0_i32_1 = arith.constant 0 : i32
    return %c0_i32, %c0_i32_0 : i32, i32
  }
  func.func @transform_2(%arg0: i32, %arg1: i32) -> (i32, i32) {
    %c0_i32 = arith.constant 0 : i32
    %c0_i32_0 = arith.constant 0 : i32
    %c0_i32_1 = arith.constant 0 : i32
    return %c0_i32, %c0_i32_0 : i32, i32
  }
  func.func @transform_3(%arg0: i32, %arg1: i32) -> (i32, i32) {
    %c0_i32 = arith.constant 0 : i32
    %c0_i32_0 = arith.constant 0 : i32
    return %c0_i32, %arg1 : i32, i32
  }
  func.func @transform_4(%arg0: i32, %arg1: i32) -> (i32, i32) {
    %c0_i32 = arith.constant 0 : i32
    return %arg0, %arg1 : i32, i32
  }
}

module attributes {stable_mosaic.version = 11 : i64} {
  func.func @_pair_logits_kernel(%arg0: i32, %arg1: memref<2x128xf32, #tpu.memory_space<vmem>>, %arg2: memref<2x128xf32, #tpu.memory_space<vmem>>, %arg3: memref<1x1xf32, #tpu.memory_space<vmem>>, %arg4: memref<2x2xf32, #tpu.memory_space<vmem>>) attributes {dimension_semantics = [#tpu.dimension_semantics<arbitrary>], iteration_bounds = array<i64: 1>, scalar_prefetch = 0 : i64, scratch_operands = 0 : i64, tpu.core_type = #tpu.core_type<tc>, window_params = [{pipeline_mode = #tpu.pipeline_mode<synchronous>, transform_indices = @transform_0, window_bounds = array<i64: 2, 128>}, {pipeline_mode = #tpu.pipeline_mode<synchronous>, transform_indices = @transform_1, window_bounds = array<i64: 2, 128>}, {pipeline_mode = #tpu.pipeline_mode<synchronous>, transform_indices = @transform_2, window_bounds = array<i64: 1, 1>}, {pipeline_mode = #tpu.pipeline_mode<synchronous>, transform_indices = @transform_3, window_bounds = array<i64: 2, 2>}]} {
    %c0 = arith.constant 0 : index
    %c0_0 = arith.constant 0 : index
    %0 = vector.load %arg1[%c0, %c0_0] : memref<2x128xf32, #tpu.memory_space<vmem>>, vector<2x128xf32>
    %c0_1 = arith.constant 0 : index
    %c0_2 = arith.constant 0 : index
    %1 = vector.load %arg2[%c0_1, %c0_2] : memref<2x128xf32, #tpu.memory_space<vmem>>, vector<2x128xf32>
    %cst = arith.constant dense<0.000000e+00> : vector<2x2xf32>
    %2 = tpu.matmul %0, %1, %cst {dimension_numbers = #tpu.dot_dimension_numbers<[1], [1], [0], [0], [0, 0, 1, 0], [], []>} : vector<2x128xf32>, vector<2x128xf32>, vector<2x2xf32> -> vector<2x2xf32>
    %c0_3 = arith.constant 0 : index
    %c0_4 = arith.constant 0 : index
    %3 = vector.load %arg3[%c0_3, %c0_4] : memref<1x1xf32, #tpu.memory_space<vmem>>, vector<1x1xf32>
    %4 = vector.extract %3[0, 0] : f32 from vector<1x1xf32>
    %cst_5 = arith.constant 2.500000e-01 : f32
    %5 = arith.mulf %4, %cst_5 : f32
    %6 = vector.broadcast %5 : f32 to vector<2x2xf32>
    %7 = arith.mulf %2, %6 : vector<2x2xf32>
    %c0_6 = arith.constant 0 : index
    %c0_7 = arith.constant 0 : index
    %8 = vector.load %arg4[%c0_6, %c0_7] : memref<2x2xf32, #tpu.memory_space<vmem>>, vector<2x2xf32>
    tpu.vector_store %arg4[%c0_6, %c0_7], %7 {strides = array<i32>} : memref<2x2xf32, #tpu.memory_space<vmem>>, vector<2x2xf32>,
    return
  }
  func.func @transform_0(%arg0: i32) -> (i32, i32) {
    %c0_i32 = arith.constant 0 : i32
    %c0_i32_0 = arith.constant 0 : i32
    %c0_i32_1 = arith.constant 0 : i32
    return %c0_i32, %c0_i32_0 : i32, i32
  }
  func.func @transform_1(%arg0: i32) -> (i32, i32) {
    %c0_i32 = arith.constant 0 : i32
    %c0_i32_0 = arith.constant 0 : i32
    %c0_i32_1 = arith.constant 0 : i32
    return %c0_i32, %c0_i32_0 : i32, i32
  }
  func.func @transform_2(%arg0: i32) -> (i32, i32) {
    %c0_i32 = arith.constant 0 : i32
    %c0_i32_0 = arith.constant 0 : i32
    %c0_i32_1 = arith.constant 0 : i32
    return %c0_i32, %c0_i32_0 : i32, i32
  }
  func.func @transform_3(%arg0: i32) -> (i32, i32) {
    %c0_i32 = arith.constant 0 : i32
    %c0_i32_0 = arith.constant 0 : i32
    %c0_i32_1 = arith.constant 0 : i32
    return %c0_i32, %c0_i32_0 : i32, i32
  }
}

module attributes {stable_mosaic.version = 11 : i64} {
  func.func @_bmm_nt_scale_kernel(%arg0: i32, %arg1: memref<1x4x32xf32, #tpu.memory_space<vmem>>, %arg2: memref<1x4x32xf32, #tpu.memory_space<vmem>>, %arg3: memref<1x1xf32, #tpu.memory_space<vmem>>, %arg4: memref<1x4x4xf32, #tpu.memory_space<vmem>>) attributes {dimension_semantics = [#tpu.dimension_semantics<parallel>], iteration_bounds = array<i64: 2>, scalar_prefetch = 0 : i64, scratch_operands = 0 : i64, tpu.core_type = #tpu.core_type<tc>, window_params = [{transform_indices = @transform_0, window_bounds = array<i64: 1, 4, 32>}, {transform_indices = @transform_1, window_bounds = array<i64: 1, 4, 32>}, {pipeline_mode = #tpu.pipeline_mode<synchronous>, transform_indices = @transform_2, window_bounds = array<i64: 1, 1>}, {transform_indices = @transform_3, window_bounds = array<i64: 1, 4, 4>}]} {
    %c0 = arith.constant 0 : index
    %c0_0 = arith.constant 0 : index
    %c0_1 = arith.constant 0 : index
    %0 = vector.load %arg1[%c0, %c0_0, %c0_1] : memref<1x4x32xf32, #tpu.memory_space<vmem>>, vector<1x4x32xf32>
    %1 = vector.shape_cast %0 : vector<1x4x32xf32> to vector<4x32xf32>
    %c0_2 = arith.constant 0 : index
    %c0_3 = arith.constant 0 : index
    %c0_4 = arith.constant 0 : index
    %2 = vector.load %arg2[%c0_2, %c0_3, %c0_4] : memref<1x4x32xf32, #tpu.memory_space<vmem>>, vector<1x4x32xf32>
    %3 = vector.shape_cast %2 : vector<1x4x32xf32> to vector<4x32xf32>
    %cst = arith.constant dense<0.000000e+00> : vector<4x4xf32>
    %4 = tpu.matmul %1, %3, %cst {dimension_numbers = #tpu.dot_dimension_numbers<[1], [1], [0], [0], [0, 0, 1, 0], [], []>} : vector<4x32xf32>, vector<4x32xf32>, vector<4x4xf32> -> vector<4x4xf32>
    %c0_5 = arith.constant 0 : index
    %c0_6 = arith.constant 0 : index
    %5 = vector.load %arg3[%c0_5, %c0_6] : memref<1x1xf32, #tpu.memory_space<vmem>>, vector<1x1xf32>
    %6 = vector.extract %5[0, 0] : f32 from vector<1x1xf32>
    %7 = vector.broadcast %6 : f32 to vector<4x4xf32>
    %8 = arith.mulf %4, %7 : vector<4x4xf32>
    %c0_7 = arith.constant 0 : index
    %c0_8 = arith.constant 0 : index
    %c0_9 = arith.constant 0 : index
    %9 = vector.load %arg4[%c0_7, %c0_8, %c0_9] : memref<1x4x4xf32, #tpu.memory_space<vmem>>, vector<1x4x4xf32>
    %10 = vector.shape_cast %9 : vector<1x4x4xf32> to vector<4x4xf32>
    %11 = vector.shape_cast %8 : vector<4x4xf32> to vector<1x4x4xf32>
    tpu.vector_store %arg4[%c0_7, %c0_8, %c0_9], %11 {strides = array<i32>} : memref<1x4x4xf32, #tpu.memory_space<vmem>>, vector<1x4x4xf32>,
    return
  }
  func.func @transform_0(%arg0: i32) -> (i32, i32, i32) {
    %c0_i32 = arith.constant 0 : i32
    %c0_i32_0 = arith.constant 0 : i32
    %c0_i32_1 = arith.constant 0 : i32
    return %arg0, %c0_i32, %c0_i32_0 : i32, i32, i32
  }
  func.func @transform_1(%arg0: i32) -> (i32, i32, i32) {
    %c0_i32 = arith.constant 0 : i32
    %c0_i32_0 = arith.constant 0 : i32
    %c0_i32_1 = arith.constant 0 : i32
    return %arg0, %c0_i32, %c0_i32_0 : i32, i32, i32
  }
  func.func @transform_2(%arg0: i32) -> (i32, i32) {
    %c0_i32 = arith.constant 0 : i32
    %c0_i32_0 = arith.constant 0 : i32
    %c0_i32_1 = arith.constant 0 : i32
    return %c0_i32, %c0_i32_0 : i32, i32
  }
  func.func @transform_3(%arg0: i32) -> (i32, i32, i32) {
    %c0_i32 = arith.constant 0 : i32
    %c0_i32_0 = arith.constant 0 : i32
    %c0_i32_1 = arith.constant 0 : i32
    return %arg0, %c0_i32, %c0_i32_0 : i32, i32, i32
  }
}

</mosaic_0001>

<llo_original>
// kernel: solarclip_forward.37
$region0: #{solarclip_forward.37}
  #allocation0 [shape = 'u32[]', space=smem, size = 0x4, offset = 0x4, fixed_abs, tag = 'smem constant byte address 0x4 - core index']
  #allocation1 [shape = 'u32[144,128]{1,0:T(1,128)}', space=vmem, size = 0x12000, scoped, tag = 'internal scratch']
  %s0 = inlined_call_operand.vmem [shape: f32[8,64], index: 0, kind: input, shape index: {}]
  %s1 = inlined_call_operand.vmem [shape: bf16[64,64], index: 1, kind: input, shape index: {}]
  %s2 = inlined_call_operand.vmem [shape: f32[8,64], index: 2, kind: output, shape index: {}]
  %s3 = sld [smem:[#allocation0]]
  $region18: #{solarclip_forward.37} parent=0
    _
  %s5 = ssub.s32 1, %s3
  %s6 = scalar_select 0, %s5, %s3
  // Predicated region
  $region2: #{solarclip_forward.37} parent=0 // pred_check
    _
  $region3: #{solarclip_forward.37} parent=0 // pred_check_branch
    %8 = sbr.rel (0) target = $region5
  $region4: #{solarclip_forward.37} parent=0 // pred_region
    _
  $region5: #{solarclip_forward.37} parent=0 // pred_fallthru
    _
  // Predicated region
  $region6: #{solarclip_forward.37} parent=0 // pred_check
    _
  $region7: #{solarclip_forward.37} parent=0 // pred_check_branch
    %10 = sbr.rel (0) target = $region9
  $region8: #{solarclip_forward.37} parent=0 // pred_region
    _
  $region9: #{solarclip_forward.37} parent=0 // pred_fallthru
    _
  %v12 = vld [vmem:[%s0] sm:$0xff]
  %v13 = vpack.c.bf16 %v12, %v12
  %v14 = vld [vmem:[%s1] sm:$0xf]
  %v15 = vld [vmem:[%s1 + $0x4] sm:$0xf]
  %v16 = vld [vmem:[%s1 + $0x8] sm:$0xf]
  %v17 = vld [vmem:[%s1 + $0xc] sm:$0xf]
  %v18 = vld [vmem:[%s1 + $0x10] sm:$0xf]
  %v19 = vld [vmem:[%s1 + $0x14] sm:$0xf]
  %v20 = vld [vmem:[%s1 + $0x18] sm:$0xf]
  %v21 = vld [vmem:[%s1 + $0x1c] sm:$0xf]
  %v30 = vunpack.c.l.b16 %v14
  %v31 = vunpack.c.l.b16 %v15
  %v32 = vunpack.c.l.b16 %v16
  %v33 = vunpack.c.l.b16 %v17
  %v34 = vunpack.c.l.b16 %v18
  %v35 = vunpack.c.l.b16 %v19
  %v36 = vunpack.c.l.b16 %v20
  %v37 = vunpack.c.l.b16 %v21
  %v38 = vpack.c.b16 %v31, %v30
  %v39 = vpack.c.b16 %v33, %v32
  %v40 = vpack.c.b16 %v35, %v34
  %v41 = vpack.c.b16 %v37, %v36
  %vm46 = vcmask 523264
  %v48 = vsel %vm46, %v13, 0
  %50 = vmatprep.subr.bf16.mxu0 0
  %51 = vmatpush1.bf16.msra.mxu0 0
  %52 = vmatprep.subr.bf16.mxu0 0
  %53 = vmatpush1.bf16.msra.mxu0 0
  %54 = vmatprep.subr.bf16.mxu0 0
  %55 = vmatpush1.bf16.msra.mxu0 0
  %56 = vmatprep.subr.bf16.mxu0 0
  %57 = vmatpush1.bf16.msra.mxu0 0
  %58 = vmatprep.subr.bf16.mxu0 0
  %59 = vmatpush1.bf16.msra.mxu0 %v41
  %60 = vmatprep.subr.bf16.mxu0 0
  %61 = vmatpush1.bf16.msra.mxu0 %v40
  %62 = vmatprep.subr.bf16.mxu0 0
  %63 = vmatpush1.bf16.msra.mxu0 %v39
  %64 = vmatprep.subr.bf16.mxu0 0
  %65 = vmatpush1.bf16.msra.mxu0 %v38
  %66 = vmatprep.subr.bf16.mxu0 0
  %67 = vmatpush2.bf16.msra.mxu0 0
  %68 = vmatprep.subr.bf16.mxu0 0
  %69 = vmatpush2.bf16.msra.mxu0 0
  %70 = vmatprep.subr.bf16.mxu0 0
  %71 = vmatpush2.bf16.msra.mxu0 0
  %72 = vmatprep.subr.bf16.mxu0 0
  %73 = vmatpush2.bf16.msra.mxu0 0
  %74 = vmatprep.subr.bf16.mxu0 0
  %75 = vmatpush2.bf16.msra.mxu0 0
  %76 = vmatprep.subr.bf16.mxu0 0
  %77 = vmatpush2.bf16.msra.mxu0 0
  %78 = vmatprep.subr.bf16.mxu0 0
  %79 = vmatpush2.bf16.msra.mxu0 0
  %80 = vmatprep.subr.bf16.mxu0 0
  %81 = vmatpush2.bf16.msra.mxu0 0
  %82 = vmatprep.mubr.bf16.mxu0 0
  %83 = vmatmul.mubr.bf16.gmra.mxu0 %v48
  %v84 = vpop.f32.mrf.mxu0
  %v85 = vadd.f32 0.0, %v84
  %v86 = vpop.f32.mrf.mxu0
  %v87 = vpop.f32.mrf.mxu0
  %v88 = vpop.f32.mrf.mxu0
  %89 = vdwg.mxu0
  %90 = vst.msk [vmem:[%s2] sm:$0xff] %vm46, %v85
  // Predicated region
  $region10: #{solarclip_forward.37} parent=0 // pred_check
    _
  $region11: #{solarclip_forward.37} parent=0 // pred_check_branch
    %92 = sbr.rel (0) target = $region13
  $region12: #{solarclip_forward.37} parent=0 // pred_region
    _
  $region13: #{solarclip_forward.37} parent=0 // pred_fallthru
    _
  // Predicated region
  $region14: #{solarclip_forward.37} parent=0 // pred_check
    _
  $region15: #{solarclip_forward.37} parent=0 // pred_check_branch
    %94 = sbr.rel (0) target = $region17
  $region16: #{solarclip_forward.37} parent=0 // pred_region
    _
  $region17: #{solarclip_forward.37} parent=0 // pred_fallthru
    _

// kernel: solarclip_forward.38
$region0: #{solarclip_forward.38}
  #allocation0 [shape = 'u32[]', space=smem, size = 0x4, offset = 0x4, fixed_abs, tag = 'smem constant byte address 0x4 - core index']
  #allocation1 [shape = 'u32[144,128]{1,0:T(1,128)}', space=vmem, size = 0x12000, scoped, tag = 'internal scratch']
  %s0 = inlined_call_operand.vmem [shape: f32[10,64], index: 0, kind: input, shape index: {}]
  %s1 = inlined_call_operand.vmem [shape: f32[1,64], index: 1, kind: input, shape index: {}]
  %s2 = inlined_call_operand.vmem [shape: f32[1,64], index: 2, kind: input, shape index: {}]
  %s3 = inlined_call_operand.vmem [shape: f32[10,64], index: 3, kind: output, shape index: {}]
  %s4 = sld [smem:[#allocation0]]
  $region22: #{solarclip_forward.38} parent=0
    _
  %s6 = ssub.s32 1, %s4
  %s7 = scalar_select 0, %s6, %s4
  // Predicated region
  $region2: #{solarclip_forward.38} parent=0 // pred_check
    _
  $region3: #{solarclip_forward.38} parent=0 // pred_check_branch
    %9 = sbr.rel (0) target = $region5
  $region4: #{solarclip_forward.38} parent=0 // pred_region
    _
  $region5: #{solarclip_forward.38} parent=0 // pred_fallthru
    _
  // Predicated region
  $region6: #{solarclip_forward.38} parent=0 // pred_check
    _
  $region7: #{solarclip_forward.38} parent=0 // pred_check_branch
    %11 = sbr.rel (0) target = $region9
  $region8: #{solarclip_forward.38} parent=0 // pred_region
    _
  $region9: #{solarclip_forward.38} parent=0 // pred_fallthru
    _
  // Predicated region
  $region10: #{solarclip_forward.38} parent=0 // pred_check
    _
  $region11: #{solarclip_forward.38} parent=0 // pred_check_branch
    %13 = sbr.rel (0) target = $region13
  $region12: #{solarclip_forward.38} parent=0 // pred_region
    _
  $region13: #{solarclip_forward.38} parent=0 // pred_fallthru
    _
  %v14 = vld [vmem:[%s0] sm:$0xff]
  %v15 = vld [vmem:[%s0 + $0x8] sm:$0x3]
  %vm16 = vcmask 523264
  %v17 = vsel %vm16, %v14, 0.0
  %18 = vadd.xlane.f32.xlu0 %v17
  %v19 = vpop.xlane.xlu0 %18
  %vm20 = vcmask 517120
  %v21 = vsel %vm20, %v15, 0.0
  %22 = vadd.xlane.f32.xlu0 %v21
  %v23 = vpop.xlane.xlu0 %22
  %v24 = vrcp.pop 64.0
  %v25 = vmul.f32 %v19, %v24
  %v26 = vmul.f32 %v23, %v24
  %v27 = vsub.f32 %v14, %v25
  %v28 = vsub.f32 %v15, %v26
  %v29 = vmul.f32 %v27, %v27
  %v30 = vmul.f32 %v28, %v28
  %v31 = vsel %vm16, %v29, 0.0
  %32 = vadd.xlane.f32.xlu0 %v31
  %v33 = vpop.xlane.xlu0 %32
  %v34 = vsel %vm20, %v30, 0.0
  %35 = vadd.xlane.f32.xlu0 %v34
  %v36 = vpop.xlane.xlu0 %35
  %v37 = vmul.f32 %v33, %v24
  %v38 = vmul.f32 %v36, %v24
  %v39 = vadd.f32 %v37, 1e-05
  %v40 = vadd.f32 %v38, 1e-05
  %v41 = vrsqrt.pop %v39
  %v42 = vrsqrt.pop %v40
  %v43 = vmul.f32 %v27, %v41
  %v44 = vmul.f32 %v28, %v42
  %v45 = vld [vmem:[%s1] sm:$0x1]
  %v47 = vlaneseq
  %v48 = vshrl.u32 %v47, 7
  %v49 = vsub.s32 0, %v48
  %v50 = vrot.slane %v45, %v49
  %v52 = vmul.f32 %v43, %v50
  %v53 = vmul.f32 %v44, %v50
  %v54 = vld [vmem:[%s2] sm:$0x1]
  %v56 = vlaneseq
  %v57 = vshrl.u32 %v56, 7
  %v58 = vsub.s32 0, %v57
  %v59 = vrot.slane %v54, %v58
  %v61 = vadd.f32 %v52, %v59
  %v62 = vadd.f32 %v53, %v59
  %63 = vst.msk [vmem:[%s3] sm:$0xff] %vm16, %v61
  %64 = vst.msk [vmem:[%s3 + $0x8] sm:$0x3] %vm20, %v62
  // Predicated region
  $region14: #{solarclip_forward.38} parent=0 // pred_check
    _
  $region15: #{solarclip_forward.38} parent=0 // pred_check_branch
    %66 = sbr.rel (0) target = $region17
  $region16: #{solarclip_forward.38} parent=0 // pred_region
    _
  $region17: #{solarclip_forward.38} parent=0 // pred_fallthru
    _
  // Predicated region
  $region18: #{solarclip_forward.38} parent=0 // pred_check
    _
  $region19: #{solarclip_forward.38} parent=0 // pred_check_branch
    %68 = sbr.rel (0) target = $region21
  $region20: #{solarclip_forward.38} parent=0 // pred_region
    _
  $region21: #{solarclip_forward.38} parent=0 // pred_fallthru
    _

// kernel: solarclip_forward.39
$region0: #{solarclip_forward.39}
  #allocation0 [shape = 'u32[]', space=smem, size = 0x4, offset = 0x4, fixed_abs, tag = 'smem constant byte address 0x4 - core index']
  #allocation1 [shape = 'u32[144,128]{1,0:T(1,128)}', space=vmem, size = 0x12000, scoped, tag = 'internal scratch']
  %s0 = inlined_call_operand.vmem [shape: f32[10,64], index: 0, kind: input, shape index: {}]
  %s1 = inlined_call_operand.vmem [shape: f32[1,64], index: 1, kind: input, shape index: {}]
  %s2 = inlined_call_operand.vmem [shape: f32[1,64], index: 2, kind: input, shape index: {}]
  %s3 = inlined_call_operand.vmem [shape: bf16[64,192], index: 3, kind: input, shape index: {}]
  %s4 = inlined_call_operand.vmem [shape: f32[1,192], index: 4, kind: input, shape index: {}]
  %s5 = inlined_call_operand.vmem [shape: f32[10,192], index: 5, kind: output, shape index: {}]
  %s6 = sld [smem:[#allocation0]]
  $region30: #{solarclip_forward.39} parent=0
    _
  %s8 = ssub.s32 1, %s6
  %s9 = scalar_select 0, %s8, %s6
  // Predicated region
  $region2: #{solarclip_forward.39} parent=0 // pred_check
    _
  $region3: #{solarclip_forward.39} parent=0 // pred_check_branch
    %11 = sbr.rel (0) target = $region5
  $region4: #{solarclip_forward.39} parent=0 // pred_region
    _
  $region5: #{solarclip_forward.39} parent=0 // pred_fallthru
    _
  // Predicated region
  $region6: #{solarclip_forward.39} parent=0 // pred_check
    _
  $region7: #{solarclip_forward.39} parent=0 // pred_check_branch
    %13 = sbr.rel (0) target = $region9
  $region8: #{solarclip_forward.39} parent=0 // pred_region
    _
  $region9: #{solarclip_forward.39} parent=0 // pred_fallthru
    _
  // Predicated region
  $region10: #{solarclip_forward.39} parent=0 // pred_check
    _
  $region11: #{solarclip_forward.39} parent=0 // pred_check_branch
    %15 = sbr.rel (0) target = $region13
  $region12: #{solarclip_forward.39} parent=0 // pred_region
    _
  $region13: #{solarclip_forward.39} parent=0 // pred_fallthru
    _
  // Predicated region
  $region14: #{solarclip_forward.39} parent=0 // pred_check
    _
  $region15: #{solarclip_forward.39} parent=0 // pred_check_branch
    %17 = sbr.rel (0) target = $region17
  $region16: #{solarclip_forward.39} parent=0 // pred_region
    _
  $region17: #{solarclip_forward.39} parent=0 // pred_fallthru
    _
  // Predicated region
  $region18: #{solarclip_forward.39} parent=0 // pred_check
    _
  $region19: #{solarclip_forward.39} parent=0 // pred_check_branch
    %19 = sbr.rel (0) target = $region21
  $region20: #{solarclip_forward.39} parent=0 // pred_region
    _
  $region21: #{solarclip_forward.39} parent=0 // pred_fallthru
    _
  %v21 = vld [vmem:[%s0] sm:$0xff]
  %v22 = vld [vmem:[%s0 + $0x8] sm:$0x3]
  %vm23 = vcmask 523264
  %v24 = vsel %vm23, %v21, 0.0
  %25 = vadd.xlane.f32.xlu0 %v24
  %v26 = vpop.xlane.xlu0 %25
  %vm27 = vcmask 517120
  %v28 = vsel %vm27, %v22, 0.0
  %29 = vadd.xlane.f32.xlu0 %v28
  %v30 = vpop.xlane.xlu0 %29
  %v31 = vrcp.pop 64.0
  %v32 = vmul.f32 %v26, %v31
  %v33 = vmul.f32 %v30, %v31
  %v34 = vsub.f32 %v21, %v32
  %v35 = vsub.f32 %v22, %v33
  %v36 = vmul.f32 %v34, %v34
  %v37 = vmul.f32 %v35, %v35
  %v38 = vsel %vm23, %v36, 0.0
  %39 = vadd.xlane.f32.xlu0 %v38
  %v40 = vpop.xlane.xlu0 %39
  %v41 = vsel %vm27, %v37, 0.0
  %42 = vadd.xlane.f32.xlu0 %v41
  %v43 = vpop.xlane.xlu0 %42
  %v44 = vmul.f32 %v40, %v31
  %v45 = vmul.f32 %v43, %v31
  %v46 = vadd.f32 %v44, 1e-05
  %v47 = vadd.f32 %v45, 1e-05
  %v48 = vrsqrt.pop %v46
  %v49 = vrsqrt.pop %v47
  %v50 = vmul.f32 %v34, %v48
  %v51 = vmul.f32 %v35, %v49
  %v52 = vld [vmem:[%s1] sm:$0x1]
  %v54 = vlaneseq
  %v55 = vshrl.u32 %v54, 7
  %v56 = vsub.s32 0, %v55
  %v57 = vrot.slane %v52, %v56
  %v59 = vmul.f32 %v50, %v57
  %v60 = vmul.f32 %v51, %v57
  %v61 = vld [vmem:[%s2] sm:$0x1]
  %v63 = vlaneseq
  %v64 = vshrl.u32 %v63, 7
  %v65 = vsub.s32 0, %v64
  %v66 = vrot.slane %v61, %v65
  %v68 = vadd.f32 %v59, %v66
  %v69 = vadd.f32 %v60, %v66
  %v70 = vpack.c.bf16 %v69, %v68
  %v71 = vld [vmem:[%s3] sm:$0xff]
  %v72 = vld [vmem:[%s3 + $0x8] sm:$0xff]
  %v73 = vld [vmem:[%s3 + $0x10] sm:$0xff]
  %v74 = vld [vmem:[%s3 + $0x18] sm:$0xff]
  %v75 = vld [vmem:[%s3 + $0x20] sm:$0xff]
  %v76 = vld [vmem:[%s3 + $0x28] sm:$0xff]
  %v77 = vld [vmem:[%s3 + $0x30] sm:$0xff]
  %v78 = vld [vmem:[%s3 + $0x38] sm:$0xff]
  %v79 = vld [vmem:[%s4] sm:$0x3]
  %v81 = vlaneseq
  %v82 = vshrl.u32 %v81, 7
  %v83 = vsub.s32 0, %v82
  %v84 = vrot.slane %v79, %v83
  %v85 = vlaneseq
  %v86 = vshrl.u32 %v85, 7
  %v87 = vsub.s32 1, %v86
  %v88 = vrot.slane %v79, %v87
  %v99 = vunpack.c.l.b16 %v71
  %v100 = vunpack.c.h.b16 %v71
  %v101 = vunpack.c.l.b16 %v72
  %v102 = vunpack.c.h.b16 %v72
  %v103 = vunpack.c.l.b16 %v73
  %v104 = vunpack.c.h.b16 %v73
  %v105 = vunpack.c.l.b16 %v74
  %v106 = vunpack.c.h.b16 %v74
  %v107 = vunpack.c.l.b16 %v75
  %v108 = vunpack.c.h.b16 %v75
  %v109 = vunpack.c.l.b16 %v76
  %v110 = vunpack.c.h.b16 %v76
  %v111 = vunpack.c.l.b16 %v77
  %v112 = vunpack.c.h.b16 %v77
  %v113 = vunpack.c.l.b16 %v78
  %v114 = vunpack.c.h.b16 %v78
  %v115 = vpack.c.b16 %v101, %v99
  %v116 = vpack.c.b16 %v102, %v100
  %v117 = vpack.c.b16 %v105, %v103
  %v118 = vpack.c.b16 %v106, %v104
  %v119 = vpack.c.b16 %v109, %v107
  %v120 = vpack.c.b16 %v110, %v108
  %v121 = vpack.c.b16 %v113, %v111
  %v122 = vpack.c.b16 %v114, %v112
  %v132 = vsel %vm23, %v70, 0
  %134 = vmatprep.subr.bf16.mxu0 0
  %135 = vmatpush1.bf16.msra.mxu0 0
  %136 = vmatprep.subr.bf16.mxu0 0
  %137 = vmatpush1.bf16.msra.mxu0 0
  %138 = vmatprep.subr.bf16.mxu0 0
  %139 = vmatpush1.bf16.msra.mxu0 0
  %140 = vmatprep.subr.bf16.mxu0 0
  %141 = vmatpush1.bf16.msra.mxu0 0
  %142 = vmatprep.subr.bf16.mxu0 %v122
  %143 = vmatpush1.bf16.msra.mxu0 %v121
  %144 = vmatprep.subr.bf16.mxu0 %v120
  %145 = vmatpush1.bf16.msra.mxu0 %v119
  %146 = vmatprep.subr.bf16.mxu0 %v118
  %147 = vmatpush1.bf16.msra.mxu0 %v117
  %148 = vmatprep.subr.bf16.mxu0 %v116
  %149 = vmatpush1.bf16.msra.mxu0 %v115
  %150 = vmatprep.subr.bf16.mxu0 0
  %151 = vmatpush2.bf16.msra.mxu0 0
  %152 = vmatprep.subr.bf16.mxu0 0
  %153 = vmatpush2.bf16.msra.mxu0 0
  %154 = vmatprep.subr.bf16.mxu0 0
  %155 = vmatpush2.bf16.msra.mxu0 0
  %156 = vmatprep.subr.bf16.mxu0 0
  %157 = vmatpush2.bf16.msra.mxu0 0
  %158 = vmatprep.subr.bf16.mxu0 0
  %159 = vmatpush2.bf16.msra.mxu0 0
  %160 = vmatprep.subr.bf16.mxu0 0
  %161 = vmatpush2.bf16.msra.mxu0 0
  %162 = vmatprep.subr.bf16.mxu0 0
  %163 = vmatpush2.bf16.msra.mxu0 0
  %164 = vmatprep.subr.bf16.mxu0 0
  %165 = vmatpush2.bf16.msra.mxu0 0
  %166 = vmatprep.mubr.bf16.mxu0 0
  %167 = vmatmul.mubr.bf16.gmra.mxu0 %v132
  %v168 = vpop.f32.mrf.mxu0
  %v169 = vadd.f32 %v84, %v168
  %v170 = vpop.f32.mrf.mxu0
  %v171 = vadd.f32 %v88, %v170
  %v172 = vpop.f32.mrf.mxu0
  %v173 = vadd.f32 %v84, %v172
  %v174 = vpop.f32.mrf.mxu0
  %v175 = vadd.f32 %v88, %v174
  %176 = vdwg.mxu0
  %177 = vst [vmem:[%s5] sm:$0xff] %v169
  %178 = vst.msk [vmem:[%s5 + $0x8] sm:$0xff] %vm23, %v171
  %179 = vst [vmem:[%s5 + $0x10] sm:$0x3] %v173
  %180 = vst.msk [vmem:[%s5 + $0x18] sm:$0x3] %vm27, %v175
  // Predicated region
  $region22: #{solarclip_forward.39} parent=0 // pred_check
    _
  $region23: #{solarclip_forward.39} parent=0 // pred_check_branch
    %182 = sbr.rel (0) target = $region25
  $region24: #{solarclip_forward.39} parent=0 // pred_region
    _
  $region25: #{solarclip_forward.39} parent=0 // pred_fallthru
    _
  // Predicated region
  $region26: #{solarclip_forward.39} parent=0 // pred_check
    _
  $region27: #{solarclip_forward.39} parent=0 // pred_check_branch
    %184 = sbr.rel (0) target = $region29
  $region28: #{solarclip_forward.39} parent=0 // pred_region
    _
  $region29: #{solarclip_forward.39} parent=0 // pred_fallthru
    _

// kernel: solarclip_forward.40
$region0: #{solarclip_forward.40}
  #allocation0 [shape = 'u32[]', space=smem, size = 0x4, offset = 0x4, fixed_abs, tag = 'smem constant byte address 0x4 - core index']
  #allocation1 [shape = 'u32[144,128]{1,0:T(1,128)}', space=vmem, size = 0x12000, scoped, tag = 'internal scratch']
  %s0 = inlined_call_operand.vmem [shape: f32[2,5,192], index: 0, kind: input, shape index: {}]
  %s1 = inlined_call_operand.vmem [shape: f32[2,5,64], index: 1, kind: input, shape index: {}]
  %s2 = inlined_call_operand.vmem [shape: bf16[64,64], index: 2, kind: input, shape index: {}]
  %s3 = inlined_call_operand.vmem [shape: f32[1,64], index: 3, kind: input, shape index: {}]
  %s4 = inlined_call_operand.vmem [shape: f32[2,5,64], index: 4, kind: output, shape index: {}]
  %s5 = sld [smem:[#allocation0]]
  $region49: #{solarclip_forward.40} parent=0
    _
  %s7 = ssub.s32 1, %s5
  %s8 = scalar_select 0, %s7, %s5
  loop: start=0, step=1, limit=4
  $region2: #{solarclip_forward.40} parent=0 // loop_pre_header
    _
  $region3: #{solarclip_forward.40} parent=0 // loop_header
    %s10 = sphi 0, %s14
    %p11 = scmp.ge.s32.totalorder %s10, 4
    %s20 = sphi 0, %s22
    %s23 = sphi 0, %s20
    %s24 = sphi 0, %s23
    %s40 = sphi 0, %s24
    %s46 = sphi 0, %s48
    %s49 = sphi 0, %s46
    %s50 = sphi 0, %s49
    %s66 = sphi 0, %s50
    %s70 = sphi 0, %s70
    %s72 = sphi 0, %s70
    %s73 = sphi 0, %s72
    %s87 = sphi 0, %s73
    %s91 = sphi 0, %s91
    %s93 = sphi 0, %s91
    %s94 = sphi 0, %s93
    %s108 = sphi 0, %s94
    %s114 = sphi 0, %s116
    %s117 = sphi 0, %s114
    %s118 = sphi 0, %s117
    %s134 = sphi 0, %s118
  $region4: #{solarclip_forward.40} parent=0 // loop_header_branch
    %13 = sbr.rel (%p11) target = $region8
  $region5: #{solarclip_forward.40} parent=0 // loop_body
    %s15 = ssub.s32 %s10, 1
    %s16 = ssub.s32 %s10, 2
    %s17 = sadd.s32 %s10, 1
    %s18 = ssub.s32 %s10, %s17
    %p19 = scmp.eq.s32.totalorder %s18, 0
    %s21 = sadd.s32 %s20, 1
    %s22 = scalar_select %p19, %s20, %s21
    %p25 = pneg %p19
    %p26 = scmp.eq.s32.totalorder %s10, 1
    %p27 = por %p25, %p26
    %p28 = scmp.ne.s32.totalorder %s20, %s23
    %p29 = scmp.eq.s32.totalorder %s10, 0
    %p30 = por %p28, %p29
    %p31 = scmp.ne.s32.totalorder %s20, %s23
    %p32 = scmp.eq.s32.totalorder %s15, 1
    %p33 = por %p31, %p32
    %p34 = scmp.ne.s32.totalorder %s23, %s24
    %p35 = scmp.eq.s32.totalorder %s15, 0
    %p36 = por %p34, %p35
    %p37 = scmp.ne.s32.totalorder %s23, %s24
    %p38 = scmp.eq.s32.totalorder %s16, 1
    %p39 = por %p37, %p38
    %p41 = scmp.ne.s32.totalorder %s24, %s40
    %p42 = scmp.eq.s32.totalorder %s16, 0
    %p43 = por %p41, %p42
    %s44 = ssub.s32 %s10, %s17
    %p45 = scmp.eq.s32.totalorder %s44, 0
    %s47 = sadd.s32 %s46, 1
    %s48 = scalar_select %p45, %s46, %s47
    %p51 = pneg %p45
    %p52 = scmp.eq.s32.totalorder %s10, 1
    %p53 = por %p51, %p52
    %p54 = scmp.ne.s32.totalorder %s46, %s49
    %p55 = scmp.eq.s32.totalorder %s10, 0
    %p56 = por %p54, %p55
    %p57 = scmp.ne.s32.totalorder %s46, %s49
    %p58 = scmp.eq.s32.totalorder %s15, 1
    %p59 = por %p57, %p58
    %p60 = scmp.ne.s32.totalorder %s49, %s50
    %p61 = scmp.eq.s32.totalorder %s15, 0
    %p62 = por %p60, %p61
    %p63 = scmp.ne.s32.totalorder %s49, %s50
    %p64 = scmp.eq.s32.totalorder %s16, 1
    %p65 = por %p63, %p64
    %p67 = scmp.ne.s32.totalorder %s50, %s66
    %p68 = scmp.eq.s32.totalorder %s16, 0
    %p69 = por %p67, %p68
    %s71 = sadd.s32 %s70, 1
    %p74 = scmp.eq.s32.totalorder %s10, 1
    %p75 = scmp.ne.s32.totalorder %s70, %s72
    %p76 = scmp.eq.s32.totalorder %s10, 0
    %p77 = por %p75, %p76
    %p78 = scmp.ne.s32.totalorder %s70, %s72
    %p79 = scmp.eq.s32.totalorder %s15, 1
    %p80 = por %p78, %p79
    %p81 = scmp.ne.s32.totalorder %s72, %s73
    %p82 = scmp.eq.s32.totalorder %s15, 0
    %p83 = por %p81, %p82
    %p84 = scmp.ne.s32.totalorder %s72, %s73
    %p85 = scmp.eq.s32.totalorder %s16, 1
    %p86 = por %p84, %p85
    %p88 = scmp.ne.s32.totalorder %s73, %s87
    %p89 = scmp.eq.s32.totalorder %s16, 0
    %p90 = por %p88, %p89
    %s92 = sadd.s32 %s91, 1
    %p95 = scmp.eq.s32.totalorder %s10, 1
    %p96 = scmp.ne.s32.totalorder %s91, %s93
    %p97 = scmp.eq.s32.totalorder %s10, 0
    %p98 = por %p96, %p97
    %p99 = scmp.ne.s32.totalorder %s91, %s93
    %p100 = scmp.eq.s32.totalorder %s15, 1
    %p101 = por %p99, %p100
    %p102 = scmp.ne.s32.totalorder %s93, %s94
    %p103 = scmp.eq.s32.totalorder %s15, 0
    %p104 = por %p102, %p103
    %p105 = scmp.ne.s32.totalorder %s93, %s94
    %p106 = scmp.eq.s32.totalorder %s16, 1
    %p107 = por %p105, %p106
    %p109 = scmp.ne.s32.totalorder %s94, %s108
    %p110 = scmp.eq.s32.totalorder %s16, 0
    %p111 = por %p109, %p110
    %s112 = ssub.s32 %s10, %s17
    %p113 = scmp.eq.s32.totalorder %s112, 0
    %s115 = sadd.s32 %s114, 1
    %s116 = scalar_select %p113, %s114, %s115
    %p119 = pneg %p113
    %p120 = scmp.eq.s32.totalorder %s10, 1
    %p121 = por %p119, %p120
    %p122 = scmp.ne.s32.totalorder %s114, %s117
    %p123 = scmp.eq.s32.totalorder %s10, 0
    %p124 = por %p122, %p123
    %p125 = scmp.ne.s32.totalorder %s114, %s117
    %p126 = scmp.eq.s32.totalorder %s15, 1
    %p127 = por %p125, %p126
    %p128 = scmp.ne.s32.totalorder %s117, %s118
    %p129 = scmp.eq.s32.totalorder %s15, 0
    %p130 = por %p128, %p129
    %p131 = scmp.ne.s32.totalorder %s117, %s118
    %p132 = scmp.eq.s32.totalorder %s16, 1
    %p133 = por %p131, %p132
    %p135 = scmp.ne.s32.totalorder %s118, %s134
    %p136 = scmp.eq.s32.totalorder %s16, 0
    %p137 = por %p135, %p136
    %p138 = scmp.le.s32.totalorder 1, %s10
    %p139 = scmp.lt.s32.totalorder %s10, 3
    %p140 = pnand %p138, %p139
    %p141 = pneg %p140
    // Predicated region
    $region9: #{solarclip_forward.40} parent=5 // pred_check
      _
    $region10: #{solarclip_forward.40} parent=5 // pred_check_branch
      %143 = sbr.rel (%p140) target = $region12
    $region11: #{solarclip_forward.40} parent=5 // pred_region
      %s144 = ssub.s32 %s10, 1
      // Predicated region
      $region13: #{solarclip_forward.40} parent=11 // pred_check
        %p145 = pneg %p83
      $region14: #{solarclip_forward.40} parent=11 // pred_check_branch
        %147 = sbr.rel (%p145) target = $region16
      $region15: #{solarclip_forward.40} parent=11 // pred_region
        _
      $region16: #{solarclip_forward.40} parent=11 // pred_fallthru
        _
      // Predicated region
      $region17: #{solarclip_forward.40} parent=11 // pred_check
        %p148 = pneg %p104
      $region18: #{solarclip_forward.40} parent=11 // pred_check_branch
        %150 = sbr.rel (%p148) target = $region20
      $region19: #{solarclip_forward.40} parent=11 // pred_region
        _
      $region20: #{solarclip_forward.40} parent=11 // pred_fallthru
        _
    $region12: #{solarclip_forward.40} parent=5 // pred_fallthru
      _
    %p151 = scmp.lt.s32.totalorder %s10, 2
    // Predicated region
    $region21: #{solarclip_forward.40} parent=5 // pred_check
      %p152 = pneg %p151
    $region22: #{solarclip_forward.40} parent=5 // pred_check_branch
      %154 = sbr.rel (%p152) target = $region24
    $region23: #{solarclip_forward.40} parent=5 // pred_region
      // Predicated region
      $region25: #{solarclip_forward.40} parent=23 // pred_check
        %p155 = pneg %p30
      $region26: #{solarclip_forward.40} parent=23 // pred_check_branch
        %157 = sbr.rel (%p155) target = $region28
      $region27: #{solarclip_forward.40} parent=23 // pred_region
        %p158 = scmp.lt.s32.totalorder %s10, 1
        %s159 = scalar_select %p158, %s10, 1
        %s160 = smul.addr %s159, 2
        %s161 = smul.addr %s160, 8
        %s162 = scalar_lea.vmem %s0, %s161
      $region28: #{solarclip_forward.40} parent=23 // pred_fallthru
        _
      // Predicated region
      $region29: #{solarclip_forward.40} parent=23 // pred_check
        %p163 = pneg %p56
      $region30: #{solarclip_forward.40} parent=23 // pred_check_branch
        %165 = sbr.rel (%p163) target = $region32
      $region31: #{solarclip_forward.40} parent=23 // pred_region
        %p166 = scmp.lt.s32.totalorder %s10, 1
        %s167 = scalar_select %p166, %s10, 1
        %s168 = smul.addr %s167, 8
        %s169 = scalar_lea.vmem %s1, %s168
      $region32: #{solarclip_forward.40} parent=23 // pred_fallthru
        _
    $region24: #{solarclip_forward.40} parent=5 // pred_fallthru
      _
    %p170 = scmp.le.s32.totalorder 1, %s10
    %p171 = scmp.lt.s32.totalorder %s10, 3
    %p172 = pnand %p170, %p171
    %p173 = pneg %p172
    // Predicated region
    $region33: #{solarclip_forward.40} parent=5 // pred_check
      _
    $region34: #{solarclip_forward.40} parent=5 // pred_check_branch
      %175 = sbr.rel (%p172) target = $region36
    $region35: #{solarclip_forward.40} parent=5 // pred_region
      %s176 = ssub.s32 %s10, 1
      %p177 = scmp.lt.s32.totalorder %s15, 1
      %s178 = scalar_select %p177, %s15, 1
      %s179 = smul.addr %s178, 2
      %s180 = smul.addr %s179, 8
      %s181 = scalar_lea.vmem %s0, %s180
      %p182 = pneg %p36
      %p183 = pneg %p33
      %p184 = scmp.lt.s32.totalorder %s15, 1
      %s185 = scalar_select %p184, %s15, 1
      %s186 = smul.addr %s185, 8
      %s187 = scalar_lea.vmem %s1, %s186
      %p188 = pneg %p62
      %p189 = pneg %p59
      %p190 = pneg %p83
      %p191 = pneg %p80
      %p192 = pneg %p104
      %p193 = pneg %p101
      %p194 = pneg %p130
      %p195 = pneg %p127
      %p196 = scmp.lt.s32.totalorder %s15, 1
      %s197 = scalar_select %p196, %s15, 1
      %s198 = smul.addr %s197, 8
      %s199 = scalar_lea.vmem %s4, %s198
      %p200 = scmp.lt.s32.totalorder %s15, 1
      %s201 = scalar_select %p200, %s15, 1
      %s202 = smul.addr %s201, 2
      %s203 = smul.addr %s202, 8
      %s204 = scalar_lea.vmem %s0, %s203
      %p205 = scmp.lt.s32.totalorder %s15, 1
      %s206 = scalar_select %p205, %s15, 1
      %s207 = smul.addr %s206, 8
      %s208 = scalar_lea.vmem %s1, %s207
      %p209 = scmp.lt.s32.totalorder %s15, 1
      %s210 = scalar_select %p209, %s15, 1
      %s211 = smul.addr %s210, 8
      %s212 = scalar_lea.vmem %s4, %s211
      %v214 = vld [vmem:[%s204] sm:$0x1f]
      %v215 = vld [vmem:[%s204 + $0x8] sm:$0x1f]
      %v216 = vpack.c.bf16 %v214, %v214
      %v217 = vpack.c.bf16 %v215, %v215
      %219 = vrot.lane.b32.xlu0 %v216, 64
      %v220 = vpop.permute.xlu0 %219
      %vm221 = vcmask 523264
      %v223 = vsel %vm221, %v216, 0
      %v226 = vsel %vm221, %v220, 0
      %228 = vmatprep.subr.bf16.mxu0 0
      %229 = vmatpush1.bf16.xpose.msra.mxu0 0
      %230 = vmatprep.subr.bf16.mxu0 0
      %231 = vmatpush1.bf16.xpose.msra.mxu0 0
      %232 = vmatprep.subr.bf16.mxu0 0
      %233 = vmatpush1.bf16.xpose.msra.mxu0 0
      %234 = vmatprep.subr.bf16.mxu0 0
      %235 = vmatpush1.bf16.xpose.msra.mxu0 0
      %236 = vmatprep.subr.bf16.mxu0 0
      %237 = vmatpush1.bf16.xpose.msra.mxu0 0
      %238 = vmatprep.subr.bf16.mxu0 0
      %239 = vmatpush1.bf16.xpose.msra.mxu0 0
      %240 = vmatprep.subr.bf16.mxu0 0
      %241 = vmatpush1.bf16.xpose.msra.mxu0 0
      %242 = vmatprep.subr.bf16.mxu0 0
      %243 = vmatpush1.bf16.xpose.msra.mxu0 %v226
      %244 = vmatprep.subr.bf16.mxu0 0
      %245 = vmatpush2.bf16.xpose.msra.mxu0 0
      %246 = vmatprep.subr.bf16.mxu0 0
      %247 = vmatpush2.bf16.xpose.msra.mxu0 0
      %248 = vmatprep.subr.bf16.mxu0 0
      %249 = vmatpush2.bf16.xpose.msra.mxu0 0
      %250 = vmatprep.subr.bf16.mxu0 0
      %251 = vmatpush2.bf16.xpose.msra.mxu0 0
      %252 = vmatprep.subr.bf16.mxu0 0
      %253 = vmatpush2.bf16.xpose.msra.mxu0 0
      %254 = vmatprep.subr.bf16.mxu0 0
      %255 = vmatpush2.bf16.xpose.msra.mxu0 0
      %256 = vmatprep.subr.bf16.mxu0 0
      %257 = vmatpush2.bf16.xpose.msra.mxu0 0
      %258 = vmatprep.subr.bf16.mxu0 0
      %259 = vmatpush2.bf16.xpose.msra.mxu0 0
      %260 = vmatprep.mubr.bf16.mxu0 0
      %261 = vmatmul.mubr.bf16.gmra.mxu0 %v223
      %v262 = vpop.f32.mrf.mxu0
      %v263 = vadd.f32 0.0, %v262
      %v264 = vpop.f32.mrf.mxu0
      %v265 = vpop.f32.mrf.mxu0
      %v266 = vpop.f32.mrf.mxu0
      %267 = vdwg.mxu0
      %v268 = vmul.f32 %v263, 0.125
      %vm269 = vcmask 36864
      %v270 = vsel %vm269, %v268, -inf
      %271 = vmax.xlane.f32.xlu0 %v270
      %v272 = vpop.xlane.xlu0 %271
      %v273 = vsub.f32 %v268, %v272
      %v274 = vmul.f32 %v273, 1.442695
      %v275 = vpow.pop %v274
      %v276 = vsel %vm269, %v275, 0.0
      %277 = vadd.xlane.f32.xlu0 %v276
      %v278 = vpop.xlane.xlu0 %277
      %v279 = vrcp.pop %v278
      %v280 = vmul.f32 %v275, %v279
      %v281 = vpack.c.bf16 %v280, %v280
      %vm282 = vcmask 39936
      %v284 = vsel %vm282, %v281, 0
      %vm286 = vcmask 1041408
      %vm287 = vcmask 1042432
      %v288 = vsel %vm286, 4294967295, 65535
      %v289 = vsel %vm287, %v288, 0
      %v291 = vand.u32 %v217, %v289
      %293 = vmatprep.subr.bf16.mxu0 0
      %294 = vmatpush1.bf16.msra.mxu0 0
      %295 = vmatprep.subr.bf16.mxu0 0
      %296 = vmatpush1.bf16.msra.mxu0 0
      %297 = vmatprep.subr.bf16.mxu0 0
      %298 = vmatpush1.bf16.msra.mxu0 0
      %299 = vmatprep.subr.bf16.mxu0 0
      %300 = vmatpush1.bf16.msra.mxu0 0
      %301 = vmatprep.subr.bf16.mxu0 0
      %302 = vmatpush1.bf16.msra.mxu0 0
      %303 = vmatprep.subr.bf16.mxu0 0
      %304 = vmatpush1.bf16.msra.mxu0 0
      %305 = vmatprep.subr.bf16.mxu0 0
      %306 = vmatpush1.bf16.msra.mxu0 0
      %307 = vmatprep.subr.bf16.mxu0 0
      %308 = vmatpush1.bf16.msra.mxu0 %v291
      %309 = vmatprep.subr.bf16.mxu0 0
      %310 = vmatpush2.bf16.msra.mxu0 0
      %311 = vmatprep.subr.bf16.mxu0 0
      %312 = vmatpush2.bf16.msra.mxu0 0
      %313 = vmatprep.subr.bf16.mxu0 0
      %314 = vmatpush2.bf16.msra.mxu0 0
      %315 = vmatprep.subr.bf16.mxu0 0
      %316 = vmatpush2.bf16.msra.mxu0 0
      %317 = vmatprep.subr.bf16.mxu0 0
      %318 = vmatpush2.bf16.msra.mxu0 0
      %319 = vmatprep.subr.bf16.mxu0 0
      %320 = vmatpush2.bf16.msra.mxu0 0
      %321 = vmatprep.subr.bf16.mxu0 0
      %322 = vmatpush2.bf16.msra.mxu0 0
      %323 = vmatprep.subr.bf16.mxu0 0
      %324 = vmatpush2.bf16.msra.mxu0 0
      %325 = vmatprep.mubr.bf16.mxu0 0
      %326 = vmatmul.mubr.bf16.gmra.mxu0 %v284
      %v327 = vpop.f32.mrf.mxu0
      %v328 = vadd.f32 0.0, %v327
      %v329 = vpop.f32.mrf.mxu0
      %v330 = vpop.f32.mrf.mxu0
      %v331 = vpop.f32.mrf.mxu0
      %332 = vdwg.mxu0
      %v333 = vpack.c.bf16 %v328, %v328
      %v334 = vld [vmem:[%s2] sm:$0xf]
      %v335 = vld [vmem:[%s2 + $0x4] sm:$0xf]
      %v336 = vld [vmem:[%s2 + $0x8] sm:$0xf]
      %v337 = vld [vmem:[%s2 + $0xc] sm:$0xf]
      %v338 = vld [vmem:[%s2 + $0x10] sm:$0xf]
      %v339 = vld [vmem:[%s2 + $0x14] sm:$0xf]
      %v340 = vld [vmem:[%s2 + $0x18] sm:$0xf]
      %v341 = vld [vmem:[%s2 + $0x1c] sm:$0xf]
      %v342 = vld [vmem:[%s3] sm:$0x1]
      %v344 = vlaneseq
      %v345 = vshrl.u32 %v344, 7
      %v346 = vsub.s32 0, %v345
      %v347 = vrot.slane %v342, %v346
      %v357 = vunpack.c.l.b16 %v334
      %v358 = vunpack.c.l.b16 %v335
      %v359 = vunpack.c.l.b16 %v336
      %v360 = vunpack.c.l.b16 %v337
      %v361 = vunpack.c.l.b16 %v338
      %v362 = vunpack.c.l.b16 %v339
      %v363 = vunpack.c.l.b16 %v340
      %v364 = vunpack.c.l.b16 %v341
      %v365 = vpack.c.b16 %v358, %v357
      %v366 = vpack.c.b16 %v360, %v359
      %v367 = vpack.c.b16 %v362, %v361
      %v368 = vpack.c.b16 %v364, %v363
      %v374 = vsel %vm221, %v333, 0
      %376 = vmatprep.subr.bf16.mxu0 0
      %377 = vmatpush1.bf16.msra.mxu0 0
      %378 = vmatprep.subr.bf16.mxu0 0
      %379 = vmatpush1.bf16.msra.mxu0 0
      %380 = vmatprep.subr.bf16.mxu0 0
      %381 = vmatpush1.bf16.msra.mxu0 0
      %382 = vmatprep.subr.bf16.mxu0 0
      %383 = vmatpush1.bf16.msra.mxu0 0
      %384 = vmatprep.subr.bf16.mxu0 0
      %385 = vmatpush1.bf16.msra.mxu0 %v368
      %386 = vmatprep.subr.bf16.mxu0 0
      %387 = vmatpush1.bf16.msra.mxu0 %v367
      %388 = vmatprep.subr.bf16.mxu0 0
      %389 = vmatpush1.bf16.msra.mxu0 %v366
      %390 = vmatprep.subr.bf16.mxu0 0
      %391 = vmatpush1.bf16.msra.mxu0 %v365
      %392 = vmatprep.subr.bf16.mxu0 0
      %393 = vmatpush2.bf16.msra.mxu0 0
      %394 = vmatprep.subr.bf16.mxu0 0
      %395 = vmatpush2.bf16.msra.mxu0 0
      %396 = vmatprep.subr.bf16.mxu0 0
      %397 = vmatpush2.bf16.msra.mxu0 0
      %398 = vmatprep.subr.bf16.mxu0 0
      %399 = vmatpush2.bf16.msra.mxu0 0
      %400 = vmatprep.subr.bf16.mxu0 0
      %401 = vmatpush2.bf16.msra.mxu0 0
      %402 = vmatprep.subr.bf16.mxu0 0
      %403 = vmatpush2.bf16.msra.mxu0 0
      %404 = vmatprep.subr.bf16.mxu0 0
      %405 = vmatpush2.bf16.msra.mxu0 0
      %406 = vmatprep.subr.bf16.mxu0 0
      %407 = vmatpush2.bf16.msra.mxu0 0
      %408 = vmatprep.mubr.bf16.mxu0 0
      %409 = vmatmul.mubr.bf16.gmra.mxu0 %v374
      %v410 = vpop.f32.mrf.mxu0
      %v411 = vadd.f32 %v347, %v410
      %v412 = vpop.f32.mrf.mxu0
      %v413 = vpop.f32.mrf.mxu0
      %v414 = vpop.f32.mrf.mxu0
      %415 = vdwg.mxu0
      %v416 = vld [vmem:[%s208] sm:$0x1f]
      %v417 = vadd.f32 %v416, %v411
      %vm418 = vcmask 520192
      %419 = vst.msk [vmem:[%s212] sm:$0x1f] %vm418, %v417
      %p420 = scmp.lt.s32.totalorder %s15, 1
      %s421 = scalar_select %p420, %s15, 1
      %s422 = smul.addr %s421, 8
      %s423 = scalar_lea.vmem %s4, %s422
      // Predicated region
      $region37: #{solarclip_forward.40} parent=35 // pred_check
        %p424 = pneg %p127
      $region38: #{solarclip_forward.40} parent=35 // pred_check_branch
        %426 = sbr.rel (%p424) target = $region40
      $region39: #{solarclip_forward.40} parent=35 // pred_region
        _
      $region40: #{solarclip_forward.40} parent=35 // pred_fallthru
        _
    $region36: #{solarclip_forward.40} parent=5 // pred_fallthru
      _
    %p427 = scmp.le.s32.totalorder 2, %s10
    // Predicated region
    $region41: #{solarclip_forward.40} parent=5 // pred_check
      %p428 = pneg %p427
    $region42: #{solarclip_forward.40} parent=5 // pred_check_branch
      %430 = sbr.rel (%p428) target = $region44
    $region43: #{solarclip_forward.40} parent=5 // pred_region
      %s431 = ssub.s32 %s10, 2
      // Predicated region
      $region45: #{solarclip_forward.40} parent=43 // pred_check
        %p432 = pneg %p133
      $region46: #{solarclip_forward.40} parent=43 // pred_check_branch
        %434 = sbr.rel (%p432) target = $region48
      $region47: #{solarclip_forward.40} parent=43 // pred_region
        %p435 = scmp.lt.s32.totalorder %s16, 1
        %s436 = scalar_select %p435, %s16, 1
        %s437 = smul.addr %s436, 8
        %s438 = scalar_lea.vmem %s4, %s437
      $region48: #{solarclip_forward.40} parent=43 // pred_fallthru
        _
    $region44: #{solarclip_forward.40} parent=5 // pred_fallthru
      _
  $region6: #{solarclip_forward.40} parent=0 // loop_footer
    %s14 = sadd.s32 1, %s10
  $region7: #{solarclip_forward.40} parent=0 // loop_footer_branch
    %9 = sbr.rel target = $region3
  $region8: #{solarclip_forward.40} parent=0 // loop_exit
    _

// kernel: solarclip_forward.42
$region0: #{solarclip_forward.42}
  #allocation0 [shape = 'u32[]', space=smem, size = 0x4, offset = 0x4, fixed_abs, tag = 'smem constant byte address 0x4 - core index']
  #allocation1 [shape = 'u32[144,128]{1,0:T(1,128)}', space=vmem, size = 0x12000, scoped, tag = 'internal scratch']
  %s0 = inlined_call_operand.vmem [shape: f32[10,256], index: 0, kind: input, shape index: {}]
  %s1 = inlined_call_operand.vmem [shape: bf16[256,64], index: 1, kind: input, shape index: {}]
  %s2 = inlined_call_operand.vmem [shape: f32[1,64], index: 2, kind: input, shape index: {}]
  %s3 = inlined_call_operand.vmem [shape: f32[10,64], index: 3, kind: input, shape index: {}]
  %s4 = inlined_call_operand.vmem [shape: f32[10,64], index: 4, kind: output, shape index: {}]
  %s5 = sld [smem:[#allocation0]]
  $region26: #{solarclip_forward.42} parent=0
    _
  %s7 = ssub.s32 1, %s5
  %s8 = scalar_select 0, %s7, %s5
  // Predicated region
  $region2: #{solarclip_forward.42} parent=0 // pred_check
    _
  $region3: #{solarclip_forward.42} parent=0 // pred_check_branch
    %10 = sbr.rel (0) target = $region5
  $region4: #{solarclip_forward.42} parent=0 // pred_region
    _
  $region5: #{solarclip_forward.42} parent=0 // pred_fallthru
    _
  // Predicated region
  $region6: #{solarclip_forward.42} parent=0 // pred_check
    _
  $region7: #{solarclip_forward.42} parent=0 // pred_check_branch
    %12 = sbr.rel (0) target = $region9
  $region8: #{solarclip_forward.42} parent=0 // pred_region
    _
  $region9: #{solarclip_forward.42} parent=0 // pred_fallthru
    _
  // Predicated region
  $region10: #{solarclip_forward.42} parent=0 // pred_check
    _
  $region11: #{solarclip_forward.42} parent=0 // pred_check_branch
    %14 = sbr.rel (0) target = $region13
  $region12: #{solarclip_forward.42} parent=0 // pred_region
    _
  $region13: #{solarclip_forward.42} parent=0 // pred_fallthru
    _
  // Predicated region
  $region14: #{solarclip_forward.42} parent=0 // pred_check
    _
  $region15: #{solarclip_forward.42} parent=0 // pred_check_branch
    %16 = sbr.rel (0) target = $region17
  $region16: #{solarclip_forward.42} parent=0 // pred_region
    _
  $region17: #{solarclip_forward.42} parent=0 // pred_fallthru
    _
  %v18 = vld [vmem:[%s0] sm:$0xff]
  %v19 = vld [vmem:[%s0 + $0x8] sm:$0xff]
  %v20 = vld [vmem:[%s0 + $0x10] sm:$0x3]
  %v21 = vld [vmem:[%s0 + $0x18] sm:$0x3]
  %v22 = vpack.c.bf16 %v20, %v18
  %v23 = vpack.c.bf16 %v21, %v19
  %v24 = vld [vmem:[%s1] sm:$0xf]
  %v25 = vld [vmem:[%s1 + $0x4] sm:$0xf]
  %v26 = vld [vmem:[%s1 + $0x8] sm:$0xf]
  %v27 = vld [vmem:[%s1 + $0xc] sm:$0xf]
  %v28 = vld [vmem:[%s1 + $0x10] sm:$0xf]
  %v29 = vld [vmem:[%s1 + $0x14] sm:$0xf]
  %v30 = vld [vmem:[%s1 + $0x18] sm:$0xf]
  %v31 = vld [vmem:[%s1 + $0x1c] sm:$0xf]
  %v32 = vld [vmem:[%s1 + $0x20] sm:$0xf]
  %v33 = vld [vmem:[%s1 + $0x24] sm:$0xf]
  %v34 = vld [vmem:[%s1 + $0x28] sm:$0xf]
  %v35 = vld [vmem:[%s1 + $0x2c] sm:$0xf]
  %v36 = vld [vmem:[%s1 + $0x30] sm:$0xf]
  %v37 = vld [vmem:[%s1 + $0x34] sm:$0xf]
  %v38 = vld [vmem:[%s1 + $0x38] sm:$0xf]
  %v39 = vld [vmem:[%s1 + $0x3c] sm:$0xf]
  %v40 = vld [vmem:[%s1 + $0x40] sm:$0xf]
  %v41 = vld [vmem:[%s1 + $0x44] sm:$0xf]
  %v42 = vld [vmem:[%s1 + $0x48] sm:$0xf]
  %v43 = vld [vmem:[%s1 + $0x4c] sm:$0xf]
  %v44 = vld [vmem:[%s1 + $0x50] sm:$0xf]
  %v45 = vld [vmem:[%s1 + $0x54] sm:$0xf]
  %v46 = vld [vmem:[%s1 + $0x58] sm:$0xf]
  %v47 = vld [vmem:[%s1 + $0x5c] sm:$0xf]
  %v48 = vld [vmem:[%s1 + $0x60] sm:$0xf]
  %v49 = vld [vmem:[%s1 + $0x64] sm:$0xf]
  %v50 = vld [vmem:[%s1 + $0x68] sm:$0xf]
  %v51 = vld [vmem:[%s1 + $0x6c] sm:$0xf]
  %v52 = vld [vmem:[%s1 + $0x70] sm:$0xf]
  %v53 = vld [vmem:[%s1 + $0x74] sm:$0xf]
  %v54 = vld [vmem:[%s1 + $0x78] sm:$0xf]
  %v55 = vld [vmem:[%s1 + $0x7c] sm:$0xf]
  %v56 = vld [vmem:[%s2] sm:$0x1]
  %v58 = vlaneseq
  %v59 = vshrl.u32 %v58, 7
  %v60 = vsub.s32 0, %v59
  %v61 = vrot.slane %v56, %v60
  %v95 = vunpack.c.l.b16 %v24
  %v96 = vunpack.c.l.b16 %v25
  %v97 = vunpack.c.l.b16 %v26
  %v98 = vunpack.c.l.b16 %v27
  %v99 = vunpack.c.l.b16 %v28
  %v100 = vunpack.c.l.b16 %v29
  %v101 = vunpack.c.l.b16 %v30
  %v102 = vunpack.c.l.b16 %v31
  %v103 = vunpack.c.l.b16 %v32
  %v104 = vunpack.c.l.b16 %v33
  %v105 = vunpack.c.l.b16 %v34
  %v106 = vunpack.c.l.b16 %v35
  %v107 = vunpack.c.l.b16 %v36
  %v108 = vunpack.c.l.b16 %v37
  %v109 = vunpack.c.l.b16 %v38
  %v110 = vunpack.c.l.b16 %v39
  %v111 = vunpack.c.l.b16 %v40
  %v112 = vunpack.c.l.b16 %v41
  %v113 = vunpack.c.l.b16 %v42
  %v114 = vunpack.c.l.b16 %v43
  %v115 = vunpack.c.l.b16 %v44
  %v116 = vunpack.c.l.b16 %v45
  %v117 = vunpack.c.l.b16 %v46
  %v118 = vunpack.c.l.b16 %v47
  %v119 = vunpack.c.l.b16 %v48
  %v120 = vunpack.c.l.b16 %v49
  %v121 = vunpack.c.l.b16 %v50
  %v122 = vunpack.c.l.b16 %v51
  %v123 = vunpack.c.l.b16 %v52
  %v124 = vunpack.c.l.b16 %v53
  %v125 = vunpack.c.l.b16 %v54
  %v126 = vunpack.c.l.b16 %v55
  %v127 = vpack.c.b16 %v96, %v95
  %v128 = vpack.c.b16 %v98, %v97
  %v129 = vpack.c.b16 %v100, %v99
  %v130 = vpack.c.b16 %v102, %v101
  %v131 = vpack.c.b16 %v104, %v103
  %v132 = vpack.c.b16 %v106, %v105
  %v133 = vpack.c.b16 %v108, %v107
  %v134 = vpack.c.b16 %v110, %v109
  %v135 = vpack.c.b16 %v112, %v111
  %v136 = vpack.c.b16 %v114, %v113
  %v137 = vpack.c.b16 %v116, %v115
  %v138 = vpack.c.b16 %v118, %v117
  %v139 = vpack.c.b16 %v120, %v119
  %v140 = vpack.c.b16 %v122, %v121
  %v141 = vpack.c.b16 %v124, %v123
  %v142 = vpack.c.b16 %v126, %v125
  %159 = vmatprep.subr.bf16.mxu0 0
  %160 = vmatpush1.bf16.msra.mxu0 %v134
  %161 = vmatprep.subr.bf16.mxu0 0
  %162 = vmatpush1.bf16.msra.mxu0 %v133
  %163 = vmatprep.subr.bf16.mxu0 0
  %164 = vmatpush1.bf16.msra.mxu0 %v132
  %165 = vmatprep.subr.bf16.mxu0 0
  %166 = vmatpush1.bf16.msra.mxu0 %v131
  %167 = vmatprep.subr.bf16.mxu0 0
  %168 = vmatpush1.bf16.msra.mxu0 %v130
  %169 = vmatprep.subr.bf16.mxu0 0
  %170 = vmatpush1.bf16.msra.mxu0 %v129
  %171 = vmatprep.subr.bf16.mxu0 0
  %172 = vmatpush1.bf16.msra.mxu0 %v128
  %173 = vmatprep.subr.bf16.mxu0 0
  %174 = vmatpush1.bf16.msra.mxu0 %v127
  %175 = vmatprep.subr.bf16.mxu0 0
  %176 = vmatpush2.bf16.msra.mxu0 %v142
  %177 = vmatprep.subr.bf16.mxu0 0
  %178 = vmatpush2.bf16.msra.mxu0 %v141
  %179 = vmatprep.subr.bf16.mxu0 0
  %180 = vmatpush2.bf16.msra.mxu0 %v140
  %181 = vmatprep.subr.bf16.mxu0 0
  %182 = vmatpush2.bf16.msra.mxu0 %v139
  %183 = vmatprep.subr.bf16.mxu0 0
  %184 = vmatpush2.bf16.msra.mxu0 %v138
  %185 = vmatprep.subr.bf16.mxu0 0
  %186 = vmatpush2.bf16.msra.mxu0 %v137
  %187 = vmatprep.subr.bf16.mxu0 0
  %188 = vmatpush2.bf16.msra.mxu0 %v136
  %189 = vmatprep.subr.bf16.mxu0 0
  %190 = vmatpush2.bf16.msra.mxu0 %v135
  %191 = vmatprep.mubr.bf16.mxu0 %v23
  %192 = vmatmul.mubr.bf16.gmra.mxu0 %v22
  %v193 = vpop.f32.mrf.mxu0
  %v194 = vadd.f32 %v61, %v193
  %v195 = vpop.f32.mrf.mxu0
  %v196 = vpop.f32.mrf.mxu0
  %v197 = vadd.f32 %v61, %v196
  %v198 = vpop.f32.mrf.mxu0
  %199 = vdwg.mxu0
  %v200 = vld [vmem:[%s3] sm:$0xff]
  %v201 = vld [vmem:[%s3 + $0x8] sm:$0x3]
  %v202 = vadd.f32 %v194, %v200
  %v203 = vadd.f32 %v197, %v201
  %vm204 = vcmask 523264
  %205 = vst.msk [vmem:[%s4] sm:$0xff] %vm204, %v202
  %vm206 = vcmask 517120
  %207 = vst.msk [vmem:[%s4 + $0x8] sm:$0x3] %vm206, %v203
  // Predicated region
  $region18: #{solarclip_forward.42} parent=0 // pred_check
    _
  $region19: #{solarclip_forward.42} parent=0 // pred_check_branch
    %209 = sbr.rel (0) target = $region21
  $region20: #{solarclip_forward.42} parent=0 // pred_region
    _
  $region21: #{solarclip_forward.42} parent=0 // pred_fallthru
    _
  // Predicated region
  $region22: #{solarclip_forward.42} parent=0 // pred_check
    _
  $region23: #{solarclip_forward.42} parent=0 // pred_check_branch
    %211 = sbr.rel (0) target = $region25
  $region24: #{solarclip_forward.42} parent=0 // pred_region
    _
  $region25: #{solarclip_forward.42} parent=0 // pred_fallthru
    _

// kernel: solarclip_forward.49
$region0: #{solarclip_forward.49}
  #allocation0 [shape = 'u32[]', space=smem, size = 0x4, offset = 0x4, fixed_abs, tag = 'smem constant byte address 0x4 - core index']
  #allocation1 [shape = 'u32[144,128]{1,0:T(1,128)}', space=vmem, size = 0x12000, scoped, tag = 'internal scratch']
  %s0 = inlined_call_operand.vmem [shape: f32[8,32], index: 0, kind: input, shape index: {}]
  %s1 = inlined_call_operand.vmem [shape: f32[8,1], index: 1, kind: input, shape index: {}]
  %s2 = inlined_call_operand.vmem [shape: f32[8,32], index: 2, kind: output, shape index: {}]
  %s3 = sld [smem:[#allocation0]]
  $region18: #{solarclip_forward.49} parent=0
    _
  %s5 = ssub.s32 1, %s3
  %s6 = scalar_select 0, %s5, %s3
  // Predicated region
  $region2: #{solarclip_forward.49} parent=0 // pred_check
    _
  $region3: #{solarclip_forward.49} parent=0 // pred_check_branch
    %8 = sbr.rel (0) target = $region5
  $region4: #{solarclip_forward.49} parent=0 // pred_region
    _
  $region5: #{solarclip_forward.49} parent=0 // pred_fallthru
    _
  // Predicated region
  $region6: #{solarclip_forward.49} parent=0 // pred_check
    _
  $region7: #{solarclip_forward.49} parent=0 // pred_check_branch
    %10 = sbr.rel (0) target = $region9
  $region8: #{solarclip_forward.49} parent=0 // pred_region
    _
  $region9: #{solarclip_forward.49} parent=0 // pred_fallthru
    _
  %v11 = vld [vmem:[%s0] sm:$0xff]
  %v12 = vmul.f32 %v11, %v11
  %vm13 = vcmask 261120
  %v14 = vsel %vm13, %v12, 0.0
  %15 = vadd.xlane.f32.xlu0 %v14
  %v16 = vpop.xlane.xlu0 %15
  %v17 = vrsqrt.pop %v16
  %v18 = vmul.f32 %v16, %v17
  %vm19 = vcmp.eq.f32.partialorder %v16, inf
  %v20 = vsel %vm19, %v16, %v18
  %vm21 = vcmp.eq.f32.partialorder %v16, 0.0
  %v22 = vand.u32 %v16, 2147483648
  %v23 = vsel %vm21, %v22, %v20
  %v24 = vadd.f32 %v23, 1e-32
  %v25 = vrcp.pop %v24
  %v26 = vmul.f32 %v11, %v25
  %v27 = vld [vmem:[%s1] sm:$0xff]
  %29 = vset.pattern.permute.xlu0 0
  %30 = vperm.xlu0 %29, %v27
  %v31 = vpop.permute.xlu0 %30
  %v33 = vmul.f32 %v26, %v31
  %34 = vst.msk [vmem:[%s2] sm:$0xff] %vm13, %v33
  // Predicated region
  $region10: #{solarclip_forward.49} parent=0 // pred_check
    _
  $region11: #{solarclip_forward.49} parent=0 // pred_check_branch
    %36 = sbr.rel (0) target = $region13
  $region12: #{solarclip_forward.49} parent=0 // pred_region
    _
  $region13: #{solarclip_forward.49} parent=0 // pred_fallthru
    _
  // Predicated region
  $region14: #{solarclip_forward.49} parent=0 // pred_check
    _
  $region15: #{solarclip_forward.49} parent=0 // pred_check_branch
    %38 = sbr.rel (0) target = $region17
  $region16: #{solarclip_forward.49} parent=0 // pred_region
    _
  $region17: #{solarclip_forward.49} parent=0 // pred_fallthru
    _

// kernel: solarclip_forward.41
$region0: #{solarclip_forward.41}
  #allocation0 [shape = 'u32[]', space=smem, size = 0x4, offset = 0x4, fixed_abs, tag = 'smem constant byte address 0x4 - core index']
  #allocation1 [shape = 'u32[144,128]{1,0:T(1,128)}', space=vmem, size = 0x12000, scoped, tag = 'internal scratch']
  %s0 = inlined_call_operand.vmem [shape: f32[10,64], index: 0, kind: input, shape index: {}]
  %s1 = inlined_call_operand.vmem [shape: f32[1,64], index: 1, kind: input, shape index: {}]
  %s2 = inlined_call_operand.vmem [shape: f32[1,64], index: 2, kind: input, shape index: {}]
  %s3 = inlined_call_operand.vmem [shape: bf16[64,256], index: 3, kind: input, shape index: {}]
  %s4 = inlined_call_operand.vmem [shape: f32[1,256], index: 4, kind: input, shape index: {}]
  %s5 = inlined_call_operand.vmem [shape: f32[10,256], index: 5, kind: output, shape index: {}]
  %s6 = sld [smem:[#allocation0]]
  $region30: #{solarclip_forward.41} parent=0
    _
  %s8 = ssub.s32 1, %s6
  %s9 = scalar_select 0, %s8, %s6
  // Predicated region
  $region2: #{solarclip_forward.41} parent=0 // pred_check
    _
  $region3: #{solarclip_forward.41} parent=0 // pred_check_branch
    %11 = sbr.rel (0) target = $region5
  $region4: #{solarclip_forward.41} parent=0 // pred_region
    _
  $region5: #{solarclip_forward.41} parent=0 // pred_fallthru
    _
  // Predicated region
  $region6: #{solarclip_forward.41} parent=0 // pred_check
    _
  $region7: #{solarclip_forward.41} parent=0 // pred_check_branch
    %13 = sbr.rel (0) target = $region9
  $region8: #{solarclip_forward.41} parent=0 // pred_region
    _
  $region9: #{solarclip_forward.41} parent=0 // pred_fallthru
    _
  // Predicated region
  $region10: #{solarclip_forward.41} parent=0 // pred_check
    _
  $region11: #{solarclip_forward.41} parent=0 // pred_check_branch
    %15 = sbr.rel (0) target = $region13
  $region12: #{solarclip_forward.41} parent=0 // pred_region
    _
  $region13: #{solarclip_forward.41} parent=0 // pred_fallthru
    _
  // Predicated region
  $region14: #{solarclip_forward.41} parent=0 // pred_check
    _
  $region15: #{solarclip_forward.41} parent=0 // pred_check_branch
    %17 = sbr.rel (0) target = $region17
  $region16: #{solarclip_forward.41} parent=0 // pred_region
    _
  $region17: #{solarclip_forward.41} parent=0 // pred_fallthru
    _
  // Predicated region
  $region18: #{solarclip_forward.41} parent=0 // pred_check
    _
  $region19: #{solarclip_forward.41} parent=0 // pred_check_branch
    %19 = sbr.rel (0) target = $region21
  $region20: #{solarclip_forward.41} parent=0 // pred_region
    _
  $region21: #{solarclip_forward.41} parent=0 // pred_fallthru
    _
  %v21 = vld [vmem:[%s0] sm:$0xff]
  %v22 = vld [vmem:[%s0 + $0x8] sm:$0x3]
  %vm23 = vcmask 523264
  %v24 = vsel %vm23, %v21, 0.0
  %25 = vadd.xlane.f32.xlu0 %v24
  %v26 = vpop.xlane.xlu0 %25
  %vm27 = vcmask 517120
  %v28 = vsel %vm27, %v22, 0.0
  %29 = vadd.xlane.f32.xlu0 %v28
  %v30 = vpop.xlane.xlu0 %29
  %v31 = vrcp.pop 64.0
  %v32 = vmul.f32 %v26, %v31
  %v33 = vmul.f32 %v30, %v31
  %v34 = vsub.f32 %v21, %v32
  %v35 = vsub.f32 %v22, %v33
  %v36 = vmul.f32 %v34, %v34
  %v37 = vmul.f32 %v35, %v35
  %v38 = vsel %vm23, %v36, 0.0
  %39 = vadd.xlane.f32.xlu0 %v38
  %v40 = vpop.xlane.xlu0 %39
  %v41 = vsel %vm27, %v37, 0.0
  %42 = vadd.xlane.f32.xlu0 %v41
  %v43 = vpop.xlane.xlu0 %42
  %v44 = vmul.f32 %v40, %v31
  %v45 = vmul.f32 %v43, %v31
  %v46 = vadd.f32 %v44, 1e-05
  %v47 = vadd.f32 %v45, 1e-05
  %v48 = vrsqrt.pop %v46
  %v49 = vrsqrt.pop %v47
  %v50 = vmul.f32 %v34, %v48
  %v51 = vmul.f32 %v35, %v49
  %v52 = vld [vmem:[%s1] sm:$0x1]
  %v54 = vlaneseq
  %v55 = vshrl.u32 %v54, 7
  %v56 = vsub.s32 0, %v55
  %v57 = vrot.slane %v52, %v56
  %v59 = vmul.f32 %v50, %v57
  %v60 = vmul.f32 %v51, %v57
  %v61 = vld [vmem:[%s2] sm:$0x1]
  %v63 = vlaneseq
  %v64 = vshrl.u32 %v63, 7
  %v65 = vsub.s32 0, %v64
  %v66 = vrot.slane %v61, %v65
  %v68 = vadd.f32 %v59, %v66
  %v69 = vadd.f32 %v60, %v66
  %v70 = vpack.c.bf16 %v69, %v68
  %v71 = vld [vmem:[%s3] sm:$0xff]
  %v72 = vld [vmem:[%s3 + $0x8] sm:$0xff]
  %v73 = vld [vmem:[%s3 + $0x10] sm:$0xff]
  %v74 = vld [vmem:[%s3 + $0x18] sm:$0xff]
  %v75 = vld [vmem:[%s3 + $0x20] sm:$0xff]
  %v76 = vld [vmem:[%s3 + $0x28] sm:$0xff]
  %v77 = vld [vmem:[%s3 + $0x30] sm:$0xff]
  %v78 = vld [vmem:[%s3 + $0x38] sm:$0xff]
  %v79 = vld [vmem:[%s4] sm:$0x3]
  %v81 = vlaneseq
  %v82 = vshrl.u32 %v81, 7
  %v83 = vsub.s32 0, %v82
  %v84 = vrot.slane %v79, %v83
  %v85 = vlaneseq
  %v86 = vshrl.u32 %v85, 7
  %v87 = vsub.s32 1, %v86
  %v88 = vrot.slane %v79, %v87
  %v99 = vunpack.c.l.b16 %v71
  %v100 = vunpack.c.h.b16 %v71
  %v101 = vunpack.c.l.b16 %v72
  %v102 = vunpack.c.h.b16 %v72
  %v103 = vunpack.c.l.b16 %v73
  %v104 = vunpack.c.h.b16 %v73
  %v105 = vunpack.c.l.b16 %v74
  %v106 = vunpack.c.h.b16 %v74
  %v107 = vunpack.c.l.b16 %v75
  %v108 = vunpack.c.h.b16 %v75
  %v109 = vunpack.c.l.b16 %v76
  %v110 = vunpack.c.h.b16 %v76
  %v111 = vunpack.c.l.b16 %v77
  %v112 = vunpack.c.h.b16 %v77
  %v113 = vunpack.c.l.b16 %v78
  %v114 = vunpack.c.h.b16 %v78
  %v115 = vpack.c.b16 %v101, %v99
  %v116 = vpack.c.b16 %v102, %v100
  %v117 = vpack.c.b16 %v105, %v103
  %v118 = vpack.c.b16 %v106, %v104
  %v119 = vpack.c.b16 %v109, %v107
  %v120 = vpack.c.b16 %v110, %v108
  %v121 = vpack.c.b16 %v113, %v111
  %v122 = vpack.c.b16 %v114, %v112
  %v132 = vsel %vm23, %v70, 0
  %134 = vmatprep.subr.bf16.mxu0 0
  %135 = vmatpush1.bf16.msra.mxu0 0
  %136 = vmatprep.subr.bf16.mxu0 0
  %137 = vmatpush1.bf16.msra.mxu0 0
  %138 = vmatprep.subr.bf16.mxu0 0
  %139 = vmatpush1.bf16.msra.mxu0 0
  %140 = vmatprep.subr.bf16.mxu0 0
  %141 = vmatpush1.bf16.msra.mxu0 0
  %142 = vmatprep.subr.bf16.mxu0 %v122
  %143 = vmatpush1.bf16.msra.mxu0 %v121
  %144 = vmatprep.subr.bf16.mxu0 %v120
  %145 = vmatpush1.bf16.msra.mxu0 %v119
  %146 = vmatprep.subr.bf16.mxu0 %v118
  %147 = vmatpush1.bf16.msra.mxu0 %v117
  %148 = vmatprep.subr.bf16.mxu0 %v116
  %149 = vmatpush1.bf16.msra.mxu0 %v115
  %150 = vmatprep.subr.bf16.mxu0 0
  %151 = vmatpush2.bf16.msra.mxu0 0
  %152 = vmatprep.subr.bf16.mxu0 0
  %153 = vmatpush2.bf16.msra.mxu0 0
  %154 = vmatprep.subr.bf16.mxu0 0
  %155 = vmatpush2.bf16.msra.mxu0 0
  %156 = vmatprep.subr.bf16.mxu0 0
  %157 = vmatpush2.bf16.msra.mxu0 0
  %158 = vmatprep.subr.bf16.mxu0 0
  %159 = vmatpush2.bf16.msra.mxu0 0
  %160 = vmatprep.subr.bf16.mxu0 0
  %161 = vmatpush2.bf16.msra.mxu0 0
  %162 = vmatprep.subr.bf16.mxu0 0
  %163 = vmatpush2.bf16.msra.mxu0 0
  %164 = vmatprep.subr.bf16.mxu0 0
  %165 = vmatpush2.bf16.msra.mxu0 0
  %166 = vmatprep.mubr.bf16.mxu0 0
  %167 = vmatmul.mubr.bf16.gmra.mxu0 %v132
  %v168 = vpop.f32.mrf.mxu0
  %v169 = vadd.f32 %v84, %v168
  %v170 = vpop.f32.mrf.mxu0
  %v171 = vadd.f32 %v88, %v170
  %v172 = vpop.f32.mrf.mxu0
  %v173 = vadd.f32 %v84, %v172
  %v174 = vpop.f32.mrf.mxu0
  %v175 = vadd.f32 %v88, %v174
  %176 = vdwg.mxu0
  %v177 = vmul.f32 %v169, 1.702
  %v178 = vmul.f32 %v171, 1.702
  %v179 = vmul.f32 %v173, 1.702
  %v180 = vmul.f32 %v175, 1.702
  %v181 = vxor.u32 %v177, 2147483648
  %v182 = vxor.u32 %v178, 2147483648
  %v183 = vxor.u32 %v179, 2147483648
  %v184 = vxor.u32 %v180, 2147483648
  %v185 = vmul.f32 %v181, 1.442695
  %v186 = vpow.pop %v185
  %v187 = vmul.f32 %v182, 1.442695
  %v188 = vpow.pop %v187
  %v189 = vmul.f32 %v183, 1.442695
  %v190 = vpow.pop %v189
  %v191 = vmul.f32 %v184, 1.442695
  %v192 = vpow.pop %v191
  %v193 = vadd.f32 %v186, 1.0
  %v194 = vadd.f32 %v188, 1.0
  %v195 = vadd.f32 %v190, 1.0
  %v196 = vadd.f32 %v192, 1.0
  %v197 = vrcp.pop %v193
  %v198 = vmul.f32 1.0, %v197
  %v199 = vrcp.pop %v194
  %v200 = vmul.f32 1.0, %v199
  %v201 = vrcp.pop %v195
  %v202 = vmul.f32 1.0, %v201
  %v203 = vrcp.pop %v196
  %v204 = vmul.f32 1.0, %v203
  %v205 = vmul.f32 %v169, %v198
  %v206 = vmul.f32 %v171, %v200
  %v207 = vmul.f32 %v173, %v202
  %v208 = vmul.f32 %v175, %v204
  %209 = vst [vmem:[%s5] sm:$0xff] %v205
  %210 = vst [vmem:[%s5 + $0x8] sm:$0xff] %v206
  %211 = vst [vmem:[%s5 + $0x10] sm:$0x3] %v207
  %212 = vst [vmem:[%s5 + $0x18] sm:$0x3] %v208
  // Predicated region
  $region22: #{solarclip_forward.41} parent=0 // pred_check
    _
  $region23: #{solarclip_forward.41} parent=0 // pred_check_branch
    %214 = sbr.rel (0) target = $region25
  $region24: #{solarclip_forward.41} parent=0 // pred_region
    _
  $region25: #{solarclip_forward.41} parent=0 // pred_fallthru
    _
  // Predicated region
  $region26: #{solarclip_forward.41} parent=0 // pred_check
    _
  $region27: #{solarclip_forward.41} parent=0 // pred_check_branch
    %216 = sbr.rel (0) target = $region29
  $region28: #{solarclip_forward.41} parent=0 // pred_region
    _
  $region29: #{solarclip_forward.41} parent=0 // pred_fallthru
    _

// kernel: solarclip_forward.47
$region0: #{solarclip_forward.47}
  #allocation0 [shape = 'u32[]', space=smem, size = 0x4, offset = 0x4, fixed_abs, tag = 'smem constant byte address 0x4 - core index']
  #allocation1 [shape = 'u32[144,128]{1,0:T(1,128)}', space=vmem, size = 0x12000, scoped, tag = 'internal scratch']
  %s0 = inlined_call_operand.vmem [shape: f32[8,64], index: 0, kind: input, shape index: {}]
  %s1 = inlined_call_operand.vmem [shape: f32[1,64], index: 1, kind: input, shape index: {}]
  %s2 = inlined_call_operand.vmem [shape: f32[1,64], index: 2, kind: input, shape index: {}]
  %s3 = inlined_call_operand.vmem [shape: bf16[64,32], index: 3, kind: input, shape index: {}]
  %s4 = inlined_call_operand.vmem [shape: f32[8,32], index: 4, kind: output, shape index: {}]
  %s5 = sld [smem:[#allocation0]]
  $region26: #{solarclip_forward.47} parent=0
    _
  %s7 = ssub.s32 1, %s5
  %s8 = scalar_select 0, %s7, %s5
  // Predicated region
  $region2: #{solarclip_forward.47} parent=0 // pred_check
    _
  $region3: #{solarclip_forward.47} parent=0 // pred_check_branch
    %10 = sbr.rel (0) target = $region5
  $region4: #{solarclip_forward.47} parent=0 // pred_region
    _
  $region5: #{solarclip_forward.47} parent=0 // pred_fallthru
    _
  // Predicated region
  $region6: #{solarclip_forward.47} parent=0 // pred_check
    _
  $region7: #{solarclip_forward.47} parent=0 // pred_check_branch
    %12 = sbr.rel (0) target = $region9
  $region8: #{solarclip_forward.47} parent=0 // pred_region
    _
  $region9: #{solarclip_forward.47} parent=0 // pred_fallthru
    _
  // Predicated region
  $region10: #{solarclip_forward.47} parent=0 // pred_check
    _
  $region11: #{solarclip_forward.47} parent=0 // pred_check_branch
    %14 = sbr.rel (0) target = $region13
  $region12: #{solarclip_forward.47} parent=0 // pred_region
    _
  $region13: #{solarclip_forward.47} parent=0 // pred_fallthru
    _
  // Predicated region
  $region14: #{solarclip_forward.47} parent=0 // pred_check
    _
  $region15: #{solarclip_forward.47} parent=0 // pred_check_branch
    %16 = sbr.rel (0) target = $region17
  $region16: #{solarclip_forward.47} parent=0 // pred_region
    _
  $region17: #{solarclip_forward.47} parent=0 // pred_fallthru
    _
  %v18 = vld [vmem:[%s0] sm:$0xff]
  %vm19 = vcmask 523264
  %v20 = vsel %vm19, %v18, 0.0
  %21 = vadd.xlane.f32.xlu0 %v20
  %v22 = vpop.xlane.xlu0 %21
  %v23 = vrcp.pop 64.0
  %v24 = vmul.f32 %v22, %v23
  %v25 = vsub.f32 %v18, %v24
  %v26 = vmul.f32 %v25, %v25
  %v27 = vsel %vm19, %v26, 0.0
  %28 = vadd.xlane.f32.xlu0 %v27
  %v29 = vpop.xlane.xlu0 %28
  %v30 = vmul.f32 %v29, %v23
  %v31 = vadd.f32 %v30, 1e-05
  %v32 = vrsqrt.pop %v31
  %v33 = vmul.f32 %v25, %v32
  %v34 = vld [vmem:[%s1] sm:$0x1]
  %v36 = vlaneseq
  %v37 = vshrl.u32 %v36, 7
  %v38 = vsub.s32 0, %v37
  %v39 = vrot.slane %v34, %v38
  %v41 = vmul.f32 %v33, %v39
  %v42 = vld [vmem:[%s2] sm:$0x1]
  %v44 = vlaneseq
  %v45 = vshrl.u32 %v44, 7
  %v46 = vsub.s32 0, %v45
  %v47 = vrot.slane %v42, %v46
  %v49 = vadd.f32 %v41, %v47
  %v50 = vpack.c.bf16 %v49, %v49
  %v51 = vld [vmem:[%s3] sm:$0xf]
  %v52 = vld [vmem:[%s3 + $0x4] sm:$0xf]
  %v53 = vld [vmem:[%s3 + $0x8] sm:$0xf]
  %v54 = vld [vmem:[%s3 + $0xc] sm:$0xf]
  %v55 = vld [vmem:[%s3 + $0x10] sm:$0xf]
  %v56 = vld [vmem:[%s3 + $0x14] sm:$0xf]
  %v57 = vld [vmem:[%s3 + $0x18] sm:$0xf]
  %v58 = vld [vmem:[%s3 + $0x1c] sm:$0xf]
  %v67 = vunpack.c.l.b16 %v51
  %v68 = vunpack.c.l.b16 %v52
  %v69 = vunpack.c.l.b16 %v53
  %v70 = vunpack.c.l.b16 %v54
  %v71 = vunpack.c.l.b16 %v55
  %v72 = vunpack.c.l.b16 %v56
  %v73 = vunpack.c.l.b16 %v57
  %v74 = vunpack.c.l.b16 %v58
  %v75 = vpack.c.b16 %v68, %v67
  %v76 = vpack.c.b16 %v70, %v69
  %v77 = vpack.c.b16 %v72, %v71
  %v78 = vpack.c.b16 %v74, %v73
  %v84 = vsel %vm19, %v50, 0
  %86 = vmatprep.subr.bf16.mxu0 0
  %87 = vmatpush1.bf16.msra.mxu0 0
  %88 = vmatprep.subr.bf16.mxu0 0
  %89 = vmatpush1.bf16.msra.mxu0 0
  %90 = vmatprep.subr.bf16.mxu0 0
  %91 = vmatpush1.bf16.msra.mxu0 0
  %92 = vmatprep.subr.bf16.mxu0 0
  %93 = vmatpush1.bf16.msra.mxu0 0
  %94 = vmatprep.subr.bf16.mxu0 0
  %95 = vmatpush1.bf16.msra.mxu0 %v78
  %96 = vmatprep.subr.bf16.mxu0 0
  %97 = vmatpush1.bf16.msra.mxu0 %v77
  %98 = vmatprep.subr.bf16.mxu0 0
  %99 = vmatpush1.bf16.msra.mxu0 %v76
  %100 = vmatprep.subr.bf16.mxu0 0
  %101 = vmatpush1.bf16.msra.mxu0 %v75
  %102 = vmatprep.subr.bf16.mxu0 0
  %103 = vmatpush2.bf16.msra.mxu0 0
  %104 = vmatprep.subr.bf16.mxu0 0
  %105 = vmatpush2.bf16.msra.mxu0 0
  %106 = vmatprep.subr.bf16.mxu0 0
  %107 = vmatpush2.bf16.msra.mxu0 0
  %108 = vmatprep.subr.bf16.mxu0 0
  %109 = vmatpush2.bf16.msra.mxu0 0
  %110 = vmatprep.subr.bf16.mxu0 0
  %111 = vmatpush2.bf16.msra.mxu0 0
  %112 = vmatprep.subr.bf16.mxu0 0
  %113 = vmatpush2.bf16.msra.mxu0 0
  %114 = vmatprep.subr.bf16.mxu0 0
  %115 = vmatpush2.bf16.msra.mxu0 0
  %116 = vmatprep.subr.bf16.mxu0 0
  %117 = vmatpush2.bf16.msra.mxu0 0
  %118 = vmatprep.mubr.bf16.mxu0 0
  %119 = vmatmul.mubr.bf16.gmra.mxu0 %v84
  %v120 = vpop.f32.mrf.mxu0
  %v121 = vadd.f32 0.0, %v120
  %v122 = vpop.f32.mrf.mxu0
  %v123 = vpop.f32.mrf.mxu0
  %v124 = vpop.f32.mrf.mxu0
  %125 = vdwg.mxu0
  %vm126 = vcmask 261120
  %127 = vst.msk [vmem:[%s4] sm:$0xff] %vm126, %v121
  // Predicated region
  $region18: #{solarclip_forward.47} parent=0 // pred_check
    _
  $region19: #{solarclip_forward.47} parent=0 // pred_check_branch
    %129 = sbr.rel (0) target = $region21
  $region20: #{solarclip_forward.47} parent=0 // pred_region
    _
  $region21: #{solarclip_forward.47} parent=0 // pred_fallthru
    _
  // Predicated region
  $region22: #{solarclip_forward.47} parent=0 // pred_check
    _
  $region23: #{solarclip_forward.47} parent=0 // pred_check_branch
    %131 = sbr.rel (0) target = $region25
  $region24: #{solarclip_forward.47} parent=0 // pred_region
    _
  $region25: #{solarclip_forward.47} parent=0 // pred_fallthru
    _

// kernel: solarclip_forward.51
$region0: #{solarclip_forward.51}
  #allocation0 [shape = 'u32[]', space=smem, size = 0x4, offset = 0x4, fixed_abs, tag = 'smem constant byte address 0x4 - core index']
  #allocation1 [shape = 'u32[144,128]{1,0:T(1,128)}', space=vmem, size = 0x12000, scoped, tag = 'internal scratch']
  #allocation2 [shape = 'f32[1,1]{1,0:T(1,128)S(1)}', space=vmem, size = 0x200, scoped, tag = 'scoped memory for solarclip_forward.51']
  %s0 = inlined_call_operand.vmem [shape: f32[2,128], index: 0, kind: input, shape index: {}]
  %s1 = inlined_call_operand.vmem [shape: f32[2,128], index: 1, kind: input, shape index: {}]
  %s2 = inlined_call_operand.<no memory space> [shape: f32[1,1], index: 2, kind: input, shape index: {}]
  %s3 = inlined_call_operand.vmem [shape: f32[2,2], index: 3, kind: output, shape index: {}]
  %s4 = sld [smem:[#allocation0]]
  $region22: #{solarclip_forward.51} parent=0
    _
  %s6 = ssub.s32 1, %s4
  %s7 = scalar_select 0, %s6, %s4
  %v8 = vstv %s2
  %9 = vst [vmem:[#allocation2] sm:$0x1] %v8
  // Predicated region
  $region2: #{solarclip_forward.51} parent=0 // pred_check
    _
  $region3: #{solarclip_forward.51} parent=0 // pred_check_branch
    %11 = sbr.rel (0) target = $region5
  $region4: #{solarclip_forward.51} parent=0 // pred_region
    _
  $region5: #{solarclip_forward.51} parent=0 // pred_fallthru
    _
  // Predicated region
  $region6: #{solarclip_forward.51} parent=0 // pred_check
    _
  $region7: #{solarclip_forward.51} parent=0 // pred_check_branch
    %13 = sbr.rel (0) target = $region9
  $region8: #{solarclip_forward.51} parent=0 // pred_region
    _
  $region9: #{solarclip_forward.51} parent=0 // pred_fallthru
    _
  // Predicated region
  $region10: #{solarclip_forward.51} parent=0 // pred_check
    _
  $region11: #{solarclip_forward.51} parent=0 // pred_check_branch
    %15 = sbr.rel (0) target = $region13
  $region12: #{solarclip_forward.51} parent=0 // pred_region
    _
  $region13: #{solarclip_forward.51} parent=0 // pred_fallthru
    _
  %v16 = vld [vmem:[%s0] sm:$0x3]
  %v17 = vld [vmem:[%s1] sm:$0x3]
  %18 = vmatprep.subr.mxu0 0.0
  %19 = vmatpush1.xpose.msra.mxu0 0.0
  %20 = vmatprep.subr.mxu0 0.0
  %21 = vmatpush1.xpose.msra.mxu0 0.0
  %22 = vmatprep.subr.mxu0 0.0
  %23 = vmatpush1.xpose.msra.mxu0 0.0
  %24 = vmatprep.subr.mxu0 0.0
  %25 = vmatpush1.xpose.msra.mxu0 0.0
  %26 = vmatprep.subr.mxu0 0.0
  %27 = vmatpush1.xpose.msra.mxu0 0.0
  %28 = vmatprep.subr.mxu0 0.0
  %29 = vmatpush1.xpose.msra.mxu0 0.0
  %30 = vmatprep.subr.mxu0 0.0
  %31 = vmatpush1.xpose.msra.mxu0 0.0
  %32 = vmatprep.subr.mxu0 0.0
  %33 = vmatpush1.xpose.msra.mxu0 0.0
  %34 = vmatprep.subr.mxu0 0.0
  %35 = vmatpush1.xpose.msra.mxu0 0.0
  %36 = vmatprep.subr.mxu0 0.0
  %37 = vmatpush1.xpose.msra.mxu0 0.0
  %38 = vmatprep.subr.mxu0 0.0
  %39 = vmatpush1.xpose.msra.mxu0 0.0
  %40 = vmatprep.subr.mxu0 0.0
  %41 = vmatpush1.xpose.msra.mxu0 0.0
  %42 = vmatprep.subr.mxu0 0.0
  %43 = vmatpush1.xpose.msra.mxu0 0.0
  %44 = vmatprep.subr.mxu0 0.0
  %45 = vmatpush1.xpose.msra.mxu0 0.0
  %46 = vmatprep.subr.mxu0 0.0
  %47 = vmatpush1.xpose.msra.mxu0 0.0
  %48 = vmatprep.subr.mxu0 0.0
  %49 = vmatpush1.xpose.msra.mxu0 %v17
  %50 = vmatprep.subr.mxu0 0.0
  %51 = vmatpush2.xpose.msra.mxu0 0.0
  %52 = vmatprep.subr.mxu0 0.0
  %53 = vmatpush2.xpose.msra.mxu0 0.0
  %54 = vmatprep.subr.mxu0 0.0
  %55 = vmatpush2.xpose.msra.mxu0 0.0
  %56 = vmatprep.subr.mxu0 0.0
  %57 = vmatpush2.xpose.msra.mxu0 0.0
  %58 = vmatprep.subr.mxu0 0.0
  %59 = vmatpush2.xpose.msra.mxu0 0.0
  %60 = vmatprep.subr.mxu0 0.0
  %61 = vmatpush2.xpose.msra.mxu0 0.0
  %62 = vmatprep.subr.mxu0 0.0
  %63 = vmatpush2.xpose.msra.mxu0 0.0
  %64 = vmatprep.subr.mxu0 0.0
  %65 = vmatpush2.xpose.msra.mxu0 0.0
  %66 = vmatprep.subr.mxu0 0.0
  %67 = vmatpush2.xpose.msra.mxu0 0.0
  %68 = vmatprep.subr.mxu0 0.0
  %69 = vmatpush2.xpose.msra.mxu0 0.0
  %70 = vmatprep.subr.mxu0 0.0
  %71 = vmatpush2.xpose.msra.mxu0 0.0
  %72 = vmatprep.subr.mxu0 0.0
  %73 = vmatpush2.xpose.msra.mxu0 0.0
  %74 = vmatprep.subr.mxu0 0.0
  %75 = vmatpush2.xpose.msra.mxu0 0.0
  %76 = vmatprep.subr.mxu0 0.0
  %77 = vmatpush2.xpose.msra.mxu0 0.0
  %78 = vmatprep.subr.mxu0 0.0
  %79 = vmatpush2.xpose.msra.mxu0 0.0
  %80 = vmatprep.subr.mxu0 0.0
  %81 = vmatpush2.xpose.msra.mxu0 0.0
  %82 = vmatprep.mubr.f32.mxu0 0.0
  %83 = vmatmul.mubr.f32.gmra.mxu0 %v16
  %v84 = vpop.f32.mrf.mxu0
  %v85 = vadd.f32 0.0, %v84
  %v86 = vpop.f32.mrf.mxu0
  %87 = vdwg.mxu0
  %v88 = vld [vmem:[#allocation2] sm:$0x1]
  %s89 = vtos %v88
  %s90 = smul.f32 %s89, 0.25
  %v91 = vstv %s90
  %v92 = vmul.f32 %v85, %v91
  %vm93 = vcmask 9216
  %94 = vst.msk [vmem:[%s3] sm:$0x3] %vm93, %v92
  // Predicated region
  $region14: #{solarclip_forward.51} parent=0 // pred_check
    _
  $region15: #{solarclip_forward.51} parent=0 // pred_check_branch
    %96 = sbr.rel (0) target = $region17
  $region16: #{solarclip_forward.51} parent=0 // pred_region
    _
  $region17: #{solarclip_forward.51} parent=0 // pred_fallthru
    _
  // Predicated region
  $region18: #{solarclip_forward.51} parent=0 // pred_check
    _
  $region19: #{solarclip_forward.51} parent=0 // pred_check_branch
    %98 = sbr.rel (0) target = $region21
  $region20: #{solarclip_forward.51} parent=0 // pred_region
    _
  $region21: #{solarclip_forward.51} parent=0 // pred_fallthru
    _

// kernel: solarclip_forward.50
$region0: #{solarclip_forward.50}
  #allocation0 [shape = 'u32[]', space=smem, size = 0x4, offset = 0x4, fixed_abs, tag = 'smem constant byte address 0x4 - core index']
  #allocation1 [shape = 'u32[144,128]{1,0:T(1,128)}', space=vmem, size = 0x12000, scoped, tag = 'internal scratch']
  #allocation2 [shape = 'f32[1,1]{1,0:T(1,128)S(1)}', space=vmem, size = 0x200, scoped, tag = 'scoped memory for solarclip_forward.50']
  %s0 = inlined_call_operand.vmem [shape: f32[2,4,32], index: 0, kind: input, shape index: {}]
  %s1 = inlined_call_operand.vmem [shape: f32[2,4,32], index: 1, kind: input, shape index: {}]
  %s2 = inlined_call_operand.<no memory space> [shape: f32[1,1], index: 2, kind: input, shape index: {}]
  %s3 = inlined_call_operand.hbm [shape: f32[2,4,4], index: 3, kind: output, shape index: {}]
  %s4 = sld [smem:[#allocation0]]
  $region45: #{solarclip_forward.50} parent=0
    _
  %s6 = ssub.s32 1, %s4
  %s7 = scalar_select 0, %s6, %s4
  %v8 = vstv %s2
  %9 = vst [vmem:[#allocation2] sm:$0x1] %v8
  $region1: #{solarclip_forward.50} parent=0
    #allocation3 [shape = 'u8[4096]{0}', space=vmem, size = 0x1000, scoped, tag = 'output window, operand 0']
    #allocation4 [shape = 's32[2]{0}', space=sflag, size = 0x8, scoped, tag = 'scoped memory for solarclip_forward.50']
    %10 = vsyncpa [#allocation4], 0
    %s11 = scalar_lea.sflag [#allocation4], 1
    %12 = vsyncpa %s11, 0
    loop: start=0, step=1, limit=4
    $region2: #{solarclip_forward.50} parent=1 // loop_pre_header
      _
    $region3: #{solarclip_forward.50} parent=1 // loop_header
      %s14 = sphi 0, %s18
      %p15 = scmp.ge.s32.totalorder %s14, 4
      %s24 = sphi 0, %s26
      %s27 = sphi 0, %s24
      %s28 = sphi 0, %s27
      %s44 = sphi 0, %s28
      %s50 = sphi 0, %s52
      %s53 = sphi 0, %s50
      %s54 = sphi 0, %s53
      %s70 = sphi 0, %s54
      %s74 = sphi 0, %s74
      %s76 = sphi 0, %s74
      %s77 = sphi 0, %s76
      %s91 = sphi 0, %s77
      %s97 = sphi 0, %s99
      %s100 = sphi 0, %s97
      %s101 = sphi 0, %s100
      %s117 = sphi 0, %s101
    $region4: #{solarclip_forward.50} parent=1 // loop_header_branch
      %17 = sbr.rel (%p15) target = $region8
    $region5: #{solarclip_forward.50} parent=1 // loop_body
      %s19 = ssub.s32 %s14, 1
      %s20 = ssub.s32 %s14, 2
      %s21 = sadd.s32 %s14, 1
      %s22 = ssub.s32 %s14, %s21
      %p23 = scmp.eq.s32.totalorder %s22, 0
      %s25 = sadd.s32 %s24, 1
      %s26 = scalar_select %p23, %s24, %s25
      %p29 = pneg %p23
      %p30 = scmp.eq.s32.totalorder %s14, 1
      %p31 = por %p29, %p30
      %p32 = scmp.ne.s32.totalorder %s24, %s27
      %p33 = scmp.eq.s32.totalorder %s14, 0
      %p34 = por %p32, %p33
      %p35 = scmp.ne.s32.totalorder %s24, %s27
      %p36 = scmp.eq.s32.totalorder %s19, 1
      %p37 = por %p35, %p36
      %p38 = scmp.ne.s32.totalorder %s27, %s28
      %p39 = scmp.eq.s32.totalorder %s19, 0
      %p40 = por %p38, %p39
      %p41 = scmp.ne.s32.totalorder %s27, %s28
      %p42 = scmp.eq.s32.totalorder %s20, 1
      %p43 = por %p41, %p42
      %p45 = scmp.ne.s32.totalorder %s28, %s44
      %p46 = scmp.eq.s32.totalorder %s20, 0
      %p47 = por %p45, %p46
      %s48 = ssub.s32 %s14, %s21
      %p49 = scmp.eq.s32.totalorder %s48, 0
      %s51 = sadd.s32 %s50, 1
      %s52 = scalar_select %p49, %s50, %s51
      %p55 = pneg %p49
      %p56 = scmp.eq.s32.totalorder %s14, 1
      %p57 = por %p55, %p56
      %p58 = scmp.ne.s32.totalorder %s50, %s53
      %p59 = scmp.eq.s32.totalorder %s14, 0
      %p60 = por %p58, %p59
      %p61 = scmp.ne.s32.totalorder %s50, %s53
      %p62 = scmp.eq.s32.totalorder %s19, 1
      %p63 = por %p61, %p62
      %p64 = scmp.ne.s32.totalorder %s53, %s54
      %p65 = scmp.eq.s32.totalorder %s19, 0
      %p66 = por %p64, %p65
      %p67 = scmp.ne.s32.totalorder %s53, %s54
      %p68 = scmp.eq.s32.totalorder %s20, 1
      %p69 = por %p67, %p68
      %p71 = scmp.ne.s32.totalorder %s54, %s70
      %p72 = scmp.eq.s32.totalorder %s20, 0
      %p73 = por %p71, %p72
      %s75 = sadd.s32 %s74, 1
      %p78 = scmp.eq.s32.totalorder %s14, 1
      %p79 = scmp.ne.s32.totalorder %s74, %s76
      %p80 = scmp.eq.s32.totalorder %s14, 0
      %p81 = por %p79, %p80
      %p82 = scmp.ne.s32.totalorder %s74, %s76
      %p83 = scmp.eq.s32.totalorder %s19, 1
      %p84 = por %p82, %p83
      %p85 = scmp.ne.s32.totalorder %s76, %s77
      %p86 = scmp.eq.s32.totalorder %s19, 0
      %p87 = por %p85, %p86
      %p88 = scmp.ne.s32.totalorder %s76, %s77
      %p89 = scmp.eq.s32.totalorder %s20, 1
      %p90 = por %p88, %p89
      %p92 = scmp.ne.s32.totalorder %s77, %s91
      %p93 = scmp.eq.s32.totalorder %s20, 0
      %p94 = por %p92, %p93
      %s95 = ssub.s32 %s14, %s21
      %p96 = scmp.eq.s32.totalorder %s95, 0
      %s98 = sadd.s32 %s97, 1
      %s99 = scalar_select %p96, %s97, %s98
      %p102 = pneg %p96
      %p103 = scmp.eq.s32.totalorder %s14, 1
      %p104 = por %p102, %p103
      %p105 = scmp.ne.s32.totalorder %s97, %s100
      %p106 = scmp.eq.s32.totalorder %s14, 0
      %p107 = por %p105, %p106
      %p108 = scmp.ne.s32.totalorder %s97, %s100
      %p109 = scmp.eq.s32.totalorder %s19, 1
      %p110 = por %p108, %p109
      %p111 = scmp.ne.s32.totalorder %s100, %s101
      %p112 = scmp.eq.s32.totalorder %s19, 0
      %p113 = por %p111, %p112
      %p114 = scmp.ne.s32.totalorder %s100, %s101
      %p115 = scmp.eq.s32.totalorder %s20, 1
      %p116 = por %p114, %p115
      %p118 = scmp.ne.s32.totalorder %s101, %s117
      %p119 = scmp.eq.s32.totalorder %s20, 0
      %p120 = por %p118, %p119
      %p121 = scmp.le.s32.totalorder 1, %s14
      %p122 = scmp.lt.s32.totalorder %s14, 3
      %p123 = pnand %p121, %p122
      %p124 = pneg %p123
      // Predicated region
      $region9: #{solarclip_forward.50} parent=5 // pred_check
        _
      $region10: #{solarclip_forward.50} parent=5 // pred_check_branch
        %126 = sbr.rel (%p123) target = $region12
      $region11: #{solarclip_forward.50} parent=5 // pred_region
        %s127 = ssub.s32 %s14, 1
        // Predicated region
        $region13: #{solarclip_forward.50} parent=11 // pred_check
          %p128 = pneg %p87
        $region14: #{solarclip_forward.50} parent=11 // pred_check_branch
          %130 = sbr.rel (%p128) target = $region16
        $region15: #{solarclip_forward.50} parent=11 // pred_region
          _
        $region16: #{solarclip_forward.50} parent=11 // pred_fallthru
          _
      $region12: #{solarclip_forward.50} parent=5 // pred_fallthru
        _
      %p131 = scmp.lt.s32.totalorder %s14, 2
      // Predicated region
      $region17: #{solarclip_forward.50} parent=5 // pred_check
        %p132 = pneg %p131
      $region18: #{solarclip_forward.50} parent=5 // pred_check_branch
        %134 = sbr.rel (%p132) target = $region20
      $region19: #{solarclip_forward.50} parent=5 // pred_region
        // Predicated region
        $region21: #{solarclip_forward.50} parent=19 // pred_check
          %p135 = pneg %p34
        $region22: #{solarclip_forward.50} parent=19 // pred_check_branch
          %137 = sbr.rel (%p135) target = $region24
        $region23: #{solarclip_forward.50} parent=19 // pred_region
          %p138 = scmp.lt.s32.totalorder %s14, 1
          %s139 = scalar_select %p138, %s14, 1
          %s140 = smul.addr %s139, 4
          %s141 = scalar_lea.vmem %s0, %s140
        $region24: #{solarclip_forward.50} parent=19 // pred_fallthru
          _
        // Predicated region
        $region25: #{solarclip_forward.50} parent=19 // pred_check
          %p142 = pneg %p60
        $region26: #{solarclip_forward.50} parent=19 // pred_check_branch
          %144 = sbr.rel (%p142) target = $region28
        $region27: #{solarclip_forward.50} parent=19 // pred_region
          %p145 = scmp.lt.s32.totalorder %s14, 1
          %s146 = scalar_select %p145, %s14, 1
          %s147 = smul.addr %s146, 4
          %s148 = scalar_lea.vmem %s1, %s147
        $region28: #{solarclip_forward.50} parent=19 // pred_fallthru
          _
      $region20: #{solarclip_forward.50} parent=5 // pred_fallthru
        _
      %p149 = scmp.le.s32.totalorder 1, %s14
      %p150 = scmp.lt.s32.totalorder %s14, 3
      %p151 = pnand %p149, %p150
      %p152 = pneg %p151
      // Predicated region
      $region29: #{solarclip_forward.50} parent=5 // pred_check
        _
      $region30: #{solarclip_forward.50} parent=5 // pred_check_branch
        %154 = sbr.rel (%p151) target = $region32
      $region31: #{solarclip_forward.50} parent=5 // pred_region
        %s155 = ssub.s32 %s14, 1
        %p156 = scmp.lt.s32.totalorder %s19, 1
        %s157 = scalar_select %p156, %s19, 1
        %s158 = smul.addr %s157, 4
        %s159 = scalar_lea.vmem %s0, %s158
        %p160 = pneg %p40
        %p161 = pneg %p37
        %p162 = scmp.lt.s32.totalorder %s19, 1
        %s163 = scalar_select %p162, %s19, 1
        %s164 = smul.addr %s163, 4
        %s165 = scalar_lea.vmem %s1, %s164
        %p166 = pneg %p66
        %p167 = pneg %p63
        %p168 = pneg %p87
        %p169 = pneg %p84
        %p170 = pneg %p113
        %p171 = pneg %p110
        %s172 = sand.u32 %s100, 1
        %s173 = scalar_lea.sflag [#allocation4], %s172
        %s174 = sand.u32 %s100, 1
        %s175 = smul.addr %s174, 4
        %s176 = scalar_lea.vmem [#allocation3], %s175
        %p177 = scmp.lt.s32.totalorder %s19, 1
        %s178 = scalar_select %p177, %s19, 1
        %s179 = smul.addr %s178, 4
        %s180 = scalar_lea.vmem %s0, %s179
        %p181 = scmp.lt.s32.totalorder %s19, 1
        %s182 = scalar_select %p181, %s19, 1
        %s183 = smul.addr %s182, 4
        %s184 = scalar_lea.vmem %s1, %s183
        %v185 = vld [vmem:[%s180] sm:$0xf]
        %v186 = vld [vmem:[%s184] sm:$0xf]
        %vm187 = vcmask 261120
        %v189 = vsel %vm187, %v185, 0
        %v192 = vsel %vm187, %v186, 0
        %194 = vmatprep.subr.mxu0 0.0
        %195 = vmatpush1.xpose.msra.mxu0 0.0
        %196 = vmatprep.subr.mxu0 0.0
        %197 = vmatpush1.xpose.msra.mxu0 0.0
        %198 = vmatprep.subr.mxu0 0.0
        %199 = vmatpush1.xpose.msra.mxu0 0.0
        %200 = vmatprep.subr.mxu0 0.0
        %201 = vmatpush1.xpose.msra.mxu0 0.0
        %202 = vmatprep.subr.mxu0 0.0
        %203 = vmatpush1.xpose.msra.mxu0 0.0
        %204 = vmatprep.subr.mxu0 0.0
        %205 = vmatpush1.xpose.msra.mxu0 0.0
        %206 = vmatprep.subr.mxu0 0.0
        %207 = vmatpush1.xpose.msra.mxu0 0.0
        %208 = vmatprep.subr.mxu0 0.0
        %209 = vmatpush1.xpose.msra.mxu0 0.0
        %210 = vmatprep.subr.mxu0 0.0
        %211 = vmatpush1.xpose.msra.mxu0 0.0
        %212 = vmatprep.subr.mxu0 0.0
        %213 = vmatpush1.xpose.msra.mxu0 0.0
        %214 = vmatprep.subr.mxu0 0.0
        %215 = vmatpush1.xpose.msra.mxu0 0.0
        %216 = vmatprep.subr.mxu0 0.0
        %217 = vmatpush1.xpose.msra.mxu0 0.0
        %218 = vmatprep.subr.mxu0 0.0
        %219 = vmatpush1.xpose.msra.mxu0 0.0
        %220 = vmatprep.subr.mxu0 0.0
        %221 = vmatpush1.xpose.msra.mxu0 0.0
        %222 = vmatprep.subr.mxu0 0.0
        %223 = vmatpush1.xpose.msra.mxu0 0.0
        %224 = vmatprep.subr.mxu0 0.0
        %225 = vmatpush1.xpose.msra.mxu0 %v192
        %226 = vmatprep.subr.mxu0 0.0
        %227 = vmatpush2.xpose.msra.mxu0 0.0
        %228 = vmatprep.subr.mxu0 0.0
        %229 = vmatpush2.xpose.msra.mxu0 0.0
        %230 = vmatprep.subr.mxu0 0.0
        %231 = vmatpush2.xpose.msra.mxu0 0.0
        %232 = vmatprep.subr.mxu0 0.0
        %233 = vmatpush2.xpose.msra.mxu0 0.0
        %234 = vmatprep.subr.mxu0 0.0
        %235 = vmatpush2.xpose.msra.mxu0 0.0
        %236 = vmatprep.subr.mxu0 0.0
        %237 = vmatpush2.xpose.msra.mxu0 0.0
        %238 = vmatprep.subr.mxu0 0.0
        %239 = vmatpush2.xpose.msra.mxu0 0.0
        %240 = vmatprep.subr.mxu0 0.0
        %241 = vmatpush2.xpose.msra.mxu0 0.0
        %242 = vmatprep.subr.mxu0 0.0
        %243 = vmatpush2.xpose.msra.mxu0 0.0
        %244 = vmatprep.subr.mxu0 0.0
        %245 = vmatpush2.xpose.msra.mxu0 0.0
        %246 = vmatprep.subr.mxu0 0.0
        %247 = vmatpush2.xpose.msra.mxu0 0.0
        %248 = vmatprep.subr.mxu0 0.0
        %249 = vmatpush2.xpose.msra.mxu0 0.0
        %250 = vmatprep.subr.mxu0 0.0
        %251 = vmatpush2.xpose.msra.mxu0 0.0
        %252 = vmatprep.subr.mxu0 0.0
        %253 = vmatpush2.xpose.msra.mxu0 0.0
        %254 = vmatprep.subr.mxu0 0.0
        %255 = vmatpush2.xpose.msra.mxu0 0.0
        %256 = vmatprep.subr.mxu0 0.0
        %257 = vmatpush2.xpose.msra.mxu0 0.0
        %258 = vmatprep.mubr.f32.mxu0 0.0
        %259 = vmatmul.mubr.f32.gmra.mxu0 %v189
        %v260 = vpop.f32.mrf.mxu0
        %v261 = vadd.f32 0.0, %v260
        %v262 = vpop.f32.mrf.mxu0
        %263 = vdwg.mxu0
        %v264 = vld [vmem:[#allocation2] sm:$0x1]
        %s265 = vtos %v264
        %v266 = vstv %s265
        %v267 = vmul.f32 %v261, %v266
        %vm268 = vcmask 27648
        %269 = vst.msk [vmem:[%s176] sm:$0xf] %vm268, %v267
        %s270 = sand.u32 %s100, 1
        %s271 = scalar_lea.sflag [#allocation4], %s270
        %s272 = sand.u32 %s100, 1
        %s273 = smul.addr %s272, 4
        %s274 = scalar_lea.vmem [#allocation3], %s273
        // Predicated region
        $region33: #{solarclip_forward.50} parent=31 // pred_check
          %p275 = pneg %p110
        $region34: #{solarclip_forward.50} parent=31 // pred_check_branch
          %277 = sbr.rel (%p275) target = $region36
        $region35: #{solarclip_forward.50} parent=31 // pred_region
          %s279 = ssub.s32 64, 64
          %280 = vsyncadd %s271, %s279
          %s281 = smul.addr %s19, 64
          %s282 = scalar_lea.hbm %s3, %s281
          %s284 = sshll.u32 %s274, 4
          %s285 = int_to_ptr.vmem [resolvable:$true] %s284
          %287 = dma.vmem_to_hbm [thread:$0]  %s285, 64, %s282, %s271
        $region36: #{solarclip_forward.50} parent=31 // pred_fallthru
          _
      $region32: #{solarclip_forward.50} parent=5 // pred_fallthru
        _
      %p288 = scmp.le.s32.totalorder 2, %s14
      // Predicated region
      $region37: #{solarclip_forward.50} parent=5 // pred_check
        %p289 = pneg %p288
      $region38: #{solarclip_forward.50} parent=5 // pred_check_branch
        %291 = sbr.rel (%p289) target = $region40
      $region39: #{solarclip_forward.50} parent=5 // pred_region
        %s292 = ssub.s32 %s14, 2
        // Predicated region
        $region41: #{solarclip_forward.50} parent=39 // pred_check
          %p293 = pneg %p116
        $region42: #{solarclip_forward.50} parent=39 // pred_check_branch
          %295 = sbr.rel (%p293) target = $region44
        $region43: #{solarclip_forward.50} parent=39 // pred_region
          %s296 = sand.u32 %s101, 1
          %s297 = scalar_lea.sflag [#allocation4], %s296
          %s298 = sand.u32 %s101, 1
          %s299 = smul.addr %s298, 4
          %s300 = scalar_lea.vmem [#allocation3], %s299
          %301 = dma.done %s297, 64
        $region44: #{solarclip_forward.50} parent=39 // pred_fallthru
          _
      $region40: #{solarclip_forward.50} parent=5 // pred_fallthru
        _
    $region6: #{solarclip_forward.50} parent=1 // loop_footer
      %s18 = sadd.s32 1, %s14
    $region7: #{solarclip_forward.50} parent=1 // loop_footer_branch
      %13 = sbr.rel target = $region3
    $region8: #{solarclip_forward.50} parent=1 // loop_exit
      _
    %302 = vsyncpa [#allocation4], 1
    %s303 = scalar_lea.sflag [#allocation4], 1
    %304 = vsyncpa %s303, 1

</llo_original>
